<compile_context>
chip_gen: v7x
topology: tpu7x:2x2x1
jax: 0.10.0
libtpu: 0.0.40
codegen_flags: <defaults>
</compile_context>

<pallas_src>
import functools

import jax
import jax.numpy as jnp
from jax.experimental import pallas as pl
from jax.experimental.pallas import tpu as pltpu


LN_EPS = 1e-5  # PyTorch nn.LayerNorm default


def _cross_attention_kernel(x1_ref, x2_ref, g_ref, b_ref,
                            wq_ref, wk_ref, wv_ref, wo_ref, bo_ref,
                            o_ref,
                            k_scr, v_scr, q_scr, ctx_scr,
                            *, heads, dim_head, scale):
    gamma = g_ref[...].astype(jnp.float32)        # (1, D)
    beta = b_ref[...].astype(jnp.float32)         # (1, D)

    def layernorm(x):
        # Two-pass (centered) variance: matches PyTorch LayerNorm and avoids
        # the catastrophic cancellation of E[x^2] - mean^2.
        xf = x.astype(jnp.float32)
        mean = jnp.mean(xf, axis=-1, keepdims=True)
        cen = xf - mean
        var = jnp.mean(cen * cen, axis=-1, keepdims=True)
        return cen * jax.lax.rsqrt(var + LN_EPS) * gamma + beta

    # ---- K / V projection of x2: once per batch element, cached in VMEM ----
    @pl.when(pl.program_id(1) == 0)
    def _():
        n2 = layernorm(x2_ref[...]).astype(k_scr.dtype)            # (N2, D)
        k_scr[...] = jnp.dot(n2, wk_ref[...],
                             preferred_element_type=jnp.float32
                             ).astype(k_scr.dtype)                 # (N2, inner)
        v_scr[...] = jnp.dot(n2, wv_ref[...],
                             preferred_element_type=jnp.float32
                             ).astype(v_scr.dtype)                 # (N2, inner)

    # ---- Q projection of this x1 tile (softmax scale folded in once) ----
    n1 = layernorm(x1_ref[...]).astype(x1_ref.dtype)               # (tN1, D)
    q = jnp.dot(n1, wq_ref[...], preferred_element_type=jnp.float32) * scale
    q_scr[...] = q.astype(q_scr.dtype)                             # (tN1, inner)

    # ---- Per-head attention (heads is a small static int -> unrolled) ----
    # TODO(synk): for very long N2, add an online-softmax N2 tile here.
    for h in range(heads):
        lo, hi = h * dim_head, (h + 1) * dim_head
        qh = q_scr[:, lo:hi]                                       # (tN1, dh)
        kh = k_scr[:, lo:hi]                                       # (N2, dh)
        vh = v_scr[:, lo:hi]                                       # (N2, dh)
        dots = jax.lax.dot_general(qh, kh, (((1,), (1,)), ((), ())),
                                   preferred_element_type=jnp.float32)  # (tN1, N2)
        m = jnp.max(dots, axis=-1, keepdims=True)
        p = jnp.exp(dots - m)
        s = jnp.sum(p, axis=-1, keepdims=True)
        oh = jnp.dot(p.astype(vh.dtype), vh,
                     preferred_element_type=jnp.float32)           # (tN1, dh)
        # Deferred softmax normalization: divide the (tN1, dh) context, not
        # the (tN1, N2) probability matrix.  (pl.reciprocal(s, approx=True) is
        # a further EUP-slot option when the accuracy budget allows.)
        ctx_scr[:, lo:hi] = (oh * (1.0 / s)).astype(ctx_scr.dtype)
        # TODO(synk): nn.Dropout on attn / in to_out not implemented
        # (p = 0.0 / eval mode -> identity).

    # ---- Single full-width output projection: K = inner fills the MXU ----
    out = jnp.dot(ctx_scr[...], wo_ref[...], preferred_element_type=jnp.float32)
    o_ref[...] = (out + bo_ref[...].astype(jnp.float32)).astype(o_ref.dtype)


def cross_attention_forward(x1, x2, params, *, heads, dim_head, tile_n1=None):
    """Fused CrossAttention forward. x1: (B, N1, D) queries, x2: (B, N2, D) keys/values."""
    B, N1, D = x1.shape
    B2, N2, D2 = x2.shape
    assert B == B2 and D == D2
    inner = heads * dim_head
    scale = float(dim_head) ** -0.5

    # N1 tile: >= 256 rows feeds the 256-wide MXU on v6e/v7x; cap at N1.
    if tile_n1 is None:
        tile_n1 = min(N1, 256)
    n1_tiles = pl.cdiv(N1, tile_n1)

    gamma = params["gamma"].reshape(1, D)
    beta = params["beta"].reshape(1, D)
    wq = params["wq"]                                 # (D, inner)
    wo = params["wo"]                                 # (inner, D)
    bo = params["bo"].reshape(1, D)
    w_qkv = params["w_qkv"]                           # (D, 3*inner); q2 block unused

    # to_qkv yields (q2, k2, v2) and q2 is discarded, so only the K and V
    # column blocks are shipped.  When `inner` is lane-aligned the blocks are
    # selected by the BlockSpec index_map on the whole array (no extra HBM
    # copies); otherwise fall back to wrapper-side slices.
    if inner % 128 == 0:
        wk_arg, wv_arg = w_qkv, w_qkv
        wk_spec = pl.BlockSpec((D, inner), lambda b, i: (0, 1))
        wv_spec = pl.BlockSpec((D, inner), lambda b, i: (0, 2))
    else:
        wk_arg = w_qkv[:, inner:2 * inner]
        wv_arg = w_qkv[:, 2 * inner:3 * inner]
        wk_spec = pl.BlockSpec((D, inner), lambda b, i: (0, 0))
        wv_spec = pl.BlockSpec((D, inner), lambda b, i: (0, 0))

    act_dt = x1.dtype
    act_bytes = jnp.dtype(act_dt).itemsize
    w_bytes = jnp.dtype(wq.dtype).itemsize

    # Explicit scoped-VMEM budget from the chosen block sizes:
    # x1/x2/out blocks (double-buffered) + weights + scratch, with 2x headroom,
    # clamped to the v7x per-core physical ceiling (64 MiB).
    vmem_need = (
        2 * (tile_n1 * D + N2 * D + tile_n1 * D) * act_bytes
        + 2 * (4 * D * inner + 3 * D) * w_bytes
        + (2 * N2 * inner + 2 * tile_n1 * inner) * act_bytes
    )
    vmem_limit = int(min(max(2 * vmem_need, 32 * 2 ** 20), 64 * 2 ** 20))

    flops = 2 * B * (N1 * D * inner            # Q projection
                     + 2 * N2 * D * inner      # K, V projections
                     + 2 * N1 * N2 * inner     # QK^T + PV over all heads
                     + N1 * inner * D)         # output projection
    transcendentals = B * (heads * N1 * N2 + N1 + N2)
    bytes_accessed = (act_bytes * B * (2 * N1 * D + N2 * D)
                      + w_bytes * (4 * D * inner + 3 * D))

    kernel = functools.partial(_cross_attention_kernel,
                               heads=heads, dim_head=dim_head, scale=scale)

    return pl.pallas_call(
        kernel,
        out_shape=jax.ShapeDtypeStruct((B, N1, D), x1.dtype),
        grid_spec=pltpu.PrefetchScalarGridSpec(
            num_scalar_prefetch=0,
            grid=(B, n1_tiles),
            in_specs=[
                pl.BlockSpec((None, tile_n1, D), lambda b, i: (b, i, 0)),  # x1
                pl.BlockSpec((None, N2, D), lambda b, i: (b, 0, 0)),       # x2
                pl.BlockSpec((1, D), lambda b, i: (0, 0)),                 # gamma
                pl.BlockSpec((1, D), lambda b, i: (0, 0)),                 # beta
                pl.BlockSpec((D, inner), lambda b, i: (0, 0)),             # W_q
                wk_spec,                                                   # W_k
                wv_spec,                                                   # W_v
                pl.BlockSpec((inner, D), lambda b, i: (0, 0)),             # W_out
                pl.BlockSpec((1, D), lambda b, i: (0, 0)),                 # b_out
            ],
            out_specs=pl.BlockSpec((None, tile_n1, D), lambda b, i: (b, i, 0)),
            scratch_shapes=[
                pltpu.VMEM((N2, inner), act_dt),        # K cache (per batch elem)
                pltpu.VMEM((N2, inner), act_dt),        # V cache (per batch elem)
                pltpu.VMEM((tile_n1, inner), act_dt),   # Q tile
                pltpu.VMEM((tile_n1, inner), act_dt),   # merged-head context
            ],
        ),
        compiler_params=pltpu.CompilerParams(
            # Batch axis is independent -> megacore-shardable on v7x.
            # The N1 axis carries the cached K/V scratch -> must stay "arbitrary".
            dimension_semantics=("parallel", "arbitrary"),
            vmem_limit_bytes=vmem_limit,
        ),
        cost_estimate=pl.CostEstimate(flops=flops,
                                      transcendentals=transcendentals,
                                      bytes_accessed=bytes_accessed),
    )(x1, x2, gamma, beta, wq, wk_arg, wv_arg, wo, bo)


def _reference_cross_attention(x1, x2, params, *, heads, dim_head):
    """Pure-JAX reference with identical semantics (for validation)."""
    inner = heads * dim_head
    gamma, beta = params["gamma"], params["beta"]

    def ln(x):
        xf = x.astype(jnp.float32)
        mean = jnp.mean(xf, axis=-1, keepdims=True)
        var = jnp.mean((xf - mean) ** 2, axis=-1, keepdims=True)
        return (xf - mean) * jax.lax.rsqrt(var + LN_EPS) * gamma + beta

    n1, n2 = ln(x1), ln(x2)
    q1 = n1 @ params["wq"]
    qkv = n2 @ params["w_qkv"]
    k2 = qkv[..., inner:2 * inner]
    v2 = qkv[..., 2 * inner:]

    def split_heads(t):
        B, N, _ = t.shape
        return t.reshape(B, N, heads, dim_head).transpose(0, 2, 1, 3)

    q1, k2, v2 = map(split_heads, (q1, k2, v2))
    dots = jnp.einsum("bhnd,bhmd->bhnm", q1, k2) * (float(dim_head) ** -0.5)
    attn = jax.nn.softmax(dots, axis=-1)
    out = jnp.einsum("bhnm,bhmd->bhnd", attn, v2)
    B, _, N1, _ = out.shape
    out = out.transpose(0, 2, 1, 3).reshape(B, N1, inner)
    return (out @ params["wo"] + params["bo"]).astype(x1.dtype)


if __name__ == "__main__":
    B, N1, N2, D = 2, 8, 16, 32
    heads, dim_head = 4, 32          # inner = 128 (lane-dense column blocks)
    inner = heads * dim_head

    key = jax.random.PRNGKey(0)
    ks = jax.random.split(key, 8)
    x1 = jax.random.normal(ks[0], (B, N1, D), dtype=jnp.float32)
    x2 = jax.random.normal(ks[1], (B, N2, D), dtype=jnp.float32)

    params = {
        "gamma": 1.0 + 0.1 * jax.random.normal(ks[2], (D,), jnp.float32),
        "beta": 0.05 * jax.random.normal(ks[3], (D,), jnp.float32),
        "wq": jax.random.normal(ks[4], (D, inner), jnp.float32) * (D ** -0.5),
        "w_qkv": jax.random.normal(ks[5], (D, 3 * inner), jnp.float32) * (D ** -0.5),
        "wo": jax.random.normal(ks[6], (inner, D), jnp.float32) * (inner ** -0.5),
        "bo": jax.random.normal(ks[7], (D,), jnp.float32) * 0.02,
    }

    out = cross_attention_forward(x1, x2, params, heads=heads, dim_head=dim_head)
    out = jax.block_until_ready(out)

    ref = _reference_cross_attention(x1, x2, params, heads=heads, dim_head=dim_head)
    assert out.shape == (B, N1, D)
    err = float(jnp.max(jnp.abs(out - ref)))
    assert jnp.allclose(out, ref, atol=2e-4, rtol=2e-4), "max abs diff = %g" % err

    print("KERNEL_OK")
</pallas_src>

<mosaic_0001>
module attributes {stable_mosaic.version = 11 : i64} {
  func.func @_cross_attention_kernel(%arg0: i32, %arg1: i32, %arg2: memref<1x8x32xf32, #tpu.memory_space<vmem>>, %arg3: memref<1x16x32xf32, #tpu.memory_space<vmem>>, %arg4: memref<1x32xf32, #tpu.memory_space<vmem>>, %arg5: memref<1x32xf32, #tpu.memory_space<vmem>>, %arg6: memref<32x128xf32, #tpu.memory_space<vmem>>, %arg7: memref<32x128xf32, #tpu.memory_space<vmem>>, %arg8: memref<32x128xf32, #tpu.memory_space<vmem>>, %arg9: memref<128x32xf32, #tpu.memory_space<vmem>>, %arg10: memref<1x32xf32, #tpu.memory_space<vmem>>, %arg11: memref<1x8x32xf32, #tpu.memory_space<vmem>>, %arg12: memref<16x128xf32, #tpu.memory_space<vmem>>, %arg13: memref<16x128xf32, #tpu.memory_space<vmem>>, %arg14: memref<8x128xf32, #tpu.memory_space<vmem>>, %arg15: memref<8x128xf32, #tpu.memory_space<vmem>>) attributes {dimension_semantics = [#tpu.dimension_semantics<parallel>, #tpu.dimension_semantics<arbitrary>], iteration_bounds = array<i64: 2, 1>, scalar_prefetch = 0 : i64, scratch_operands = 4 : i64, tpu.core_type = #tpu.core_type<tc>, window_params = [{transform_indices = @transform_0, window_bounds = array<i64: 1, 8, 32>}, {transform_indices = @transform_1, window_bounds = array<i64: 1, 16, 32>}, {pipeline_mode = #tpu.pipeline_mode<synchronous>, transform_indices = @transform_2, window_bounds = array<i64: 1, 32>}, {pipeline_mode = #tpu.pipeline_mode<synchronous>, transform_indices = @transform_3, window_bounds = array<i64: 1, 32>}, {pipeline_mode = #tpu.pipeline_mode<synchronous>, transform_indices = @transform_4, window_bounds = array<i64: 32, 128>}, {transform_indices = @transform_5, window_bounds = array<i64: 32, 128>}, {transform_indices = @transform_6, window_bounds = array<i64: 32, 128>}, {pipeline_mode = #tpu.pipeline_mode<synchronous>, transform_indices = @transform_7, window_bounds = array<i64: 128, 32>}, {pipeline_mode = #tpu.pipeline_mode<synchronous>, transform_indices = @transform_8, window_bounds = array<i64: 1, 32>}, {transform_indices = @transform_9, window_bounds = array<i64: 1, 8, 32>}]} {
    %c0 = arith.constant 0 : index
    %c0_0 = arith.constant 0 : index
    %0 = vector.load %arg4[%c0, %c0_0] : memref<1x32xf32, #tpu.memory_space<vmem>>, vector<1x32xf32>
    %c0_1 = arith.constant 0 : index
    %c0_2 = arith.constant 0 : index
    %1 = vector.load %arg5[%c0_1, %c0_2] : memref<1x32xf32, #tpu.memory_space<vmem>>, vector<1x32xf32>
    %c0_i32 = arith.constant 0 : i32
    %2 = arith.cmpi eq, %arg1, %c0_i32 : i32
    %3 = arith.extui %2 : i1 to i32
    %c0_i32_3 = arith.constant 0 : i32
    %4 = arith.cmpi ne, %3, %c0_i32_3 : i32
    scf.if %4 {
      %c0_76 = arith.constant 0 : index
      %c0_77 = arith.constant 0 : index
      %c0_78 = arith.constant 0 : index
      %109 = vector.load %arg3[%c0_76, %c0_77, %c0_78] : memref<1x16x32xf32, #tpu.memory_space<vmem>>, vector<1x16x32xf32>
      %110 = vector.shape_cast %109 : vector<1x16x32xf32> to vector<16x32xf32>
      %cst_79 = arith.constant dense<0.000000e+00> : vector<16xf32>
      %111 = vector.multi_reduction <add>, %110, %cst_79 [1] : vector<16x32xf32> to vector<16xf32>
      %112 = vector.shape_cast %111 : vector<16xf32> to vector<16x1xf32>
      %cst_80 = arith.constant 3.200000e+01 : f32
      %113 = vector.broadcast %cst_80 : f32 to vector<16x1xf32>
      %114 = arith.divf %112, %113 : vector<16x1xf32>
      %115 = vector.broadcast %114 : vector<16x1xf32> to vector<16x32xf32>
      %116 = arith.subf %110, %115 : vector<16x32xf32>
      %117 = arith.mulf %116, %116 : vector<16x32xf32>
      %cst_81 = arith.constant dense<0.000000e+00> : vector<16xf32>
      %118 = vector.multi_reduction <add>, %117, %cst_81 [1] : vector<16x32xf32> to vector<16xf32>
      %119 = vector.shape_cast %118 : vector<16xf32> to vector<16x1xf32>
      %cst_82 = arith.constant 3.200000e+01 : f32
      %120 = vector.broadcast %cst_82 : f32 to vector<16x1xf32>
      %121 = arith.divf %119, %120 : vector<16x1xf32>
      %cst_83 = arith.constant 9.99999974E-6 : f32
      %122 = vector.broadcast %cst_83 : f32 to vector<16x1xf32>
      %123 = arith.addf %121, %122 : vector<16x1xf32>
      %124 = math.rsqrt %123 : vector<16x1xf32>
      %125 = vector.broadcast %124 : vector<16x1xf32> to vector<16x32xf32>
      %126 = arith.mulf %116, %125 : vector<16x32xf32>
      %127 = vector.broadcast %0 : vector<1x32xf32> to vector<16x32xf32>
      %128 = arith.mulf %126, %127 : vector<16x32xf32>
      %129 = vector.broadcast %1 : vector<1x32xf32> to vector<16x32xf32>
      %130 = arith.addf %128, %129 : vector<16x32xf32>
      %c0_84 = arith.constant 0 : index
      %c0_85 = arith.constant 0 : index
      %131 = vector.load %arg7[%c0_84, %c0_85] : memref<32x128xf32, #tpu.memory_space<vmem>>, vector<32x128xf32>
      %cst_86 = arith.constant dense<0.000000e+00> : vector<16x128xf32>
      %132 = tpu.matmul %130, %131, %cst_86 {dimension_numbers = #tpu.dot_dimension_numbers<[1], [0], [0], [1], [0, 0, 1, 1], [], []>} : vector<16x32xf32>, vector<32x128xf32>, vector<16x128xf32> -> vector<16x128xf32>
      %c0_87 = arith.constant 0 : index
      %c0_88 = arith.constant 0 : index
      %133 = vector.load %arg12[%c0_87, %c0_88] : memref<16x128xf32, #tpu.memory_space<vmem>>, vector<16x128xf32>
      tpu.vector_store %arg12[%c0_87, %c0_88], %132 {strides = array<i32>} : memref<16x128xf32, #tpu.memory_space<vmem>>, vector<16x128xf32>,
      %c0_89 = arith.constant 0 : index
      %c0_90 = arith.constant 0 : index
      %134 = vector.load %arg8[%c0_89, %c0_90] : memref<32x128xf32, #tpu.memory_space<vmem>>, vector<32x128xf32>
      %cst_91 = arith.constant dense<0.000000e+00> : vector<16x128xf32>
      %135 = tpu.matmul %130, %134, %cst_91 {dimension_numbers = #tpu.dot_dimension_numbers<[1], [0], [0], [1], [0, 0, 1, 1], [], []>} : vector<16x32xf32>, vector<32x128xf32>, vector<16x128xf32> -> vector<16x128xf32>
      %c0_92 = arith.constant 0 : index
      %c0_93 = arith.constant 0 : index
      %136 = vector.load %arg13[%c0_92, %c0_93] : memref<16x128xf32, #tpu.memory_space<vmem>>, vector<16x128xf32>
      tpu.vector_store %arg13[%c0_92, %c0_93], %135 {strides = array<i32>} : memref<16x128xf32, #tpu.memory_space<vmem>>, vector<16x128xf32>,
    } else {
    }
    %c0_4 = arith.constant 0 : index
    %c0_5 = arith.constant 0 : index
    %c0_6 = arith.constant 0 : index
    %5 = vector.load %arg2[%c0_4, %c0_5, %c0_6] : memref<1x8x32xf32, #tpu.memory_space<vmem>>, vector<1x8x32xf32>
    %6 = vector.shape_cast %5 : vector<1x8x32xf32> to vector<8x32xf32>
    %cst = arith.constant dense<0.000000e+00> : vector<8xf32>
    %7 = vector.multi_reduction <add>, %6, %cst [1] : vector<8x32xf32> to vector<8xf32>
    %8 = vector.shape_cast %7 : vector<8xf32> to vector<8x1xf32>
    %cst_7 = arith.constant 3.200000e+01 : f32
    %9 = vector.broadcast %cst_7 : f32 to vector<8x1xf32>
    %10 = arith.divf %8, %9 : vector<8x1xf32>
    %11 = vector.broadcast %10 : vector<8x1xf32> to vector<8x32xf32>
    %12 = arith.subf %6, %11 : vector<8x32xf32>
    %13 = arith.mulf %12, %12 : vector<8x32xf32>
    %cst_8 = arith.constant dense<0.000000e+00> : vector<8xf32>
    %14 = vector.multi_reduction <add>, %13, %cst_8 [1] : vector<8x32xf32> to vector<8xf32>
    %15 = vector.shape_cast %14 : vector<8xf32> to vector<8x1xf32>
    %cst_9 = arith.constant 3.200000e+01 : f32
    %16 = vector.broadcast %cst_9 : f32 to vector<8x1xf32>
    %17 = arith.divf %15, %16 : vector<8x1xf32>
    %cst_10 = arith.constant 9.99999974E-6 : f32
    %18 = vector.broadcast %cst_10 : f32 to vector<8x1xf32>
    %19 = arith.addf %17, %18 : vector<8x1xf32>
    %20 = math.rsqrt %19 : vector<8x1xf32>
    %21 = vector.broadcast %20 : vector<8x1xf32> to vector<8x32xf32>
    %22 = arith.mulf %12, %21 : vector<8x32xf32>
    %23 = vector.broadcast %0 : vector<1x32xf32> to vector<8x32xf32>
    %24 = arith.mulf %22, %23 : vector<8x32xf32>
    %25 = vector.broadcast %1 : vector<1x32xf32> to vector<8x32xf32>
    %26 = arith.addf %24, %25 : vector<8x32xf32>
    %c0_11 = arith.constant 0 : index
    %c0_12 = arith.constant 0 : index
    %27 = vector.load %arg6[%c0_11, %c0_12] : memref<32x128xf32, #tpu.memory_space<vmem>>, vector<32x128xf32>
    %cst_13 = arith.constant dense<0.000000e+00> : vector<8x128xf32>
    %28 = tpu.matmul %26, %27, %cst_13 {dimension_numbers = #tpu.dot_dimension_numbers<[1], [0], [0], [1], [0, 0, 1, 1], [], []>} : vector<8x32xf32>, vector<32x128xf32>, vector<8x128xf32> -> vector<8x128xf32>
    %cst_14 = arith.constant 0.176776692 : f32
    %29 = vector.broadcast %cst_14 : f32 to vector<8x128xf32>
    %30 = arith.mulf %28, %29 : vector<8x128xf32>
    %c0_15 = arith.constant 0 : index
    %c0_16 = arith.constant 0 : index
    %31 = vector.load %arg14[%c0_15, %c0_16] : memref<8x128xf32, #tpu.memory_space<vmem>>, vector<8x128xf32>
    tpu.vector_store %arg14[%c0_15, %c0_16], %30 {strides = array<i32>} : memref<8x128xf32, #tpu.memory_space<vmem>>, vector<8x128xf32>,
    %c0_17 = arith.constant 0 : index
    %c0_18 = arith.constant 0 : index
    %32 = vector.load %arg14[%c0_17, %c0_18] : memref<8x128xf32, #tpu.memory_space<vmem>>, vector<8x32xf32>
    %c0_19 = arith.constant 0 : index
    %c0_20 = arith.constant 0 : index
    %33 = vector.load %arg12[%c0_19, %c0_20] : memref<16x128xf32, #tpu.memory_space<vmem>>, vector<16x32xf32>
    %c0_21 = arith.constant 0 : index
    %c0_22 = arith.constant 0 : index
    %34 = vector.load %arg13[%c0_21, %c0_22] : memref<16x128xf32, #tpu.memory_space<vmem>>, vector<16x32xf32>
    %cst_23 = arith.constant dense<0.000000e+00> : vector<8x16xf32>
    %35 = tpu.matmul %32, %33, %cst_23 {dimension_numbers = #tpu.dot_dimension_numbers<[1], [1], [0], [0], [0, 0, 1, 0], [], []>} : vector<8x32xf32>, vector<16x32xf32>, vector<8x16xf32> -> vector<8x16xf32>
    %cst_24 = arith.constant dense<0xFF800000> : vector<8xf32>
    %36 = vector.multi_reduction <maximumf>, %35, %cst_24 [1] : vector<8x16xf32> to vector<8xf32>
    %37 = vector.shape_cast %36 : vector<8xf32> to vector<8x1xf32>
    %38 = vector.broadcast %37 : vector<8x1xf32> to vector<8x16xf32>
    %39 = arith.subf %35, %38 : vector<8x16xf32>
    %40 = math.exp %39 : vector<8x16xf32>
    %cst_25 = arith.constant dense<0.000000e+00> : vector<8xf32>
    %41 = vector.multi_reduction <add>, %40, %cst_25 [1] : vector<8x16xf32> to vector<8xf32>
    %42 = vector.shape_cast %41 : vector<8xf32> to vector<8x1xf32>
    %cst_26 = arith.constant dense<0.000000e+00> : vector<8x32xf32>
    %43 = tpu.matmul %40, %34, %cst_26 {dimension_numbers = #tpu.dot_dimension_numbers<[1], [0], [0], [1], [0, 0, 1, 1], [], []>} : vector<8x16xf32>, vector<16x32xf32>, vector<8x32xf32> -> vector<8x32xf32>
    %cst_27 = arith.constant 1.000000e+00 : f32
    %44 = vector.broadcast %cst_27 : f32 to vector<8x1xf32>
    %45 = arith.divf %44, %42 : vector<8x1xf32>
    %46 = vector.broadcast %45 : vector<8x1xf32> to vector<8x32xf32>
    %47 = arith.mulf %43, %46 : vector<8x32xf32>
    %c0_28 = arith.constant 0 : index
    %c0_29 = arith.constant 0 : index
    %48 = vector.load %arg15[%c0_28, %c0_29] : memref<8x128xf32, #tpu.memory_space<vmem>>, vector<8x32xf32>
    tpu.vector_store %arg15[%c0_28, %c0_29], %47 {strides = array<i32>} : memref<8x128xf32, #tpu.memory_space<vmem>>, vector<8x32xf32>,
    %c0_30 = arith.constant 0 : index
    %c32 = arith.constant 32 : index
    %49 = vector.load %arg14[%c0_30, %c32] : memref<8x128xf32, #tpu.memory_space<vmem>>, vector<8x32xf32>
    %c0_31 = arith.constant 0 : index
    %c32_32 = arith.constant 32 : index
    %50 = vector.load %arg12[%c0_31, %c32_32] : memref<16x128xf32, #tpu.memory_space<vmem>>, vector<16x32xf32>
    %c0_33 = arith.constant 0 : index
    %c32_34 = arith.constant 32 : index
    %51 = vector.load %arg13[%c0_33, %c32_34] : memref<16x128xf32, #tpu.memory_space<vmem>>, vector<16x32xf32>
    %cst_35 = arith.constant dense<0.000000e+00> : vector<8x16xf32>
    %52 = tpu.matmul %49, %50, %cst_35 {dimension_numbers = #tpu.dot_dimension_numbers<[1], [1], [0], [0], [0, 0, 1, 0], [], []>} : vector<8x32xf32>, vector<16x32xf32>, vector<8x16xf32> -> vector<8x16xf32>
    %cst_36 = arith.constant dense<0xFF800000> : vector<8xf32>
    %53 = vector.multi_reduction <maximumf>, %52, %cst_36 [1] : vector<8x16xf32> to vector<8xf32>
    %54 = vector.shape_cast %53 : vector<8xf32> to vector<8x1xf32>
    %55 = vector.broadcast %54 : vector<8x1xf32> to vector<8x16xf32>
    %56 = arith.subf %52, %55 : vector<8x16xf32>
    %57 = math.exp %56 : vector<8x16xf32>
    %cst_37 = arith.constant dense<0.000000e+00> : vector<8xf32>
    %58 = vector.multi_reduction <add>, %57, %cst_37 [1] : vector<8x16xf32> to vector<8xf32>
    %59 = vector.shape_cast %58 : vector<8xf32> to vector<8x1xf32>
    %cst_38 = arith.constant dense<0.000000e+00> : vector<8x32xf32>
    %60 = tpu.matmul %57, %51, %cst_38 {dimension_numbers = #tpu.dot_dimension_numbers<[1], [0], [0], [1], [0, 0, 1, 1], [], []>} : vector<8x16xf32>, vector<16x32xf32>, vector<8x32xf32> -> vector<8x32xf32>
    %cst_39 = arith.constant 1.000000e+00 : f32
    %61 = vector.broadcast %cst_39 : f32 to vector<8x1xf32>
    %62 = arith.divf %61, %59 : vector<8x1xf32>
    %63 = vector.broadcast %62 : vector<8x1xf32> to vector<8x32xf32>
    %64 = arith.mulf %60, %63 : vector<8x32xf32>
    %c0_40 = arith.constant 0 : index
    %c32_41 = arith.constant 32 : index
    %65 = vector.load %arg15[%c0_40, %c32_41] : memref<8x128xf32, #tpu.memory_space<vmem>>, vector<8x32xf32>
    tpu.vector_store %arg15[%c0_40, %c32_41], %64 {strides = array<i32>} : memref<8x128xf32, #tpu.memory_space<vmem>>, vector<8x32xf32>,
    %c0_42 = arith.constant 0 : index
    %c64 = arith.constant 64 : index
    %66 = vector.load %arg14[%c0_42, %c64] : memref<8x128xf32, #tpu.memory_space<vmem>>, vector<8x32xf32>
    %c0_43 = arith.constant 0 : index
    %c64_44 = arith.constant 64 : index
    %67 = vector.load %arg12[%c0_43, %c64_44] : memref<16x128xf32, #tpu.memory_space<vmem>>, vector<16x32xf32>
    %c0_45 = arith.constant 0 : index
    %c64_46 = arith.constant 64 : index
    %68 = vector.load %arg13[%c0_45, %c64_46] : memref<16x128xf32, #tpu.memory_space<vmem>>, vector<16x32xf32>
    %cst_47 = arith.constant dense<0.000000e+00> : vector<8x16xf32>
    %69 = tpu.matmul %66, %67, %cst_47 {dimension_numbers = #tpu.dot_dimension_numbers<[1], [1], [0], [0], [0, 0, 1, 0], [], []>} : vector<8x32xf32>, vector<16x32xf32>, vector<8x16xf32> -> vector<8x16xf32>
    %cst_48 = arith.constant dense<0xFF800000> : vector<8xf32>
    %70 = vector.multi_reduction <maximumf>, %69, %cst_48 [1] : vector<8x16xf32> to vector<8xf32>
    %71 = vector.shape_cast %70 : vector<8xf32> to vector<8x1xf32>
    %72 = vector.broadcast %71 : vector<8x1xf32> to vector<8x16xf32>
    %73 = arith.subf %69, %72 : vector<8x16xf32>
    %74 = math.exp %73 : vector<8x16xf32>
    %cst_49 = arith.constant dense<0.000000e+00> : vector<8xf32>
    %75 = vector.multi_reduction <add>, %74, %cst_49 [1] : vector<8x16xf32> to vector<8xf32>
    %76 = vector.shape_cast %75 : vector<8xf32> to vector<8x1xf32>
    %cst_50 = arith.constant dense<0.000000e+00> : vector<8x32xf32>
    %77 = tpu.matmul %74, %68, %cst_50 {dimension_numbers = #tpu.dot_dimension_numbers<[1], [0], [0], [1], [0, 0, 1, 1], [], []>} : vector<8x16xf32>, vector<16x32xf32>, vector<8x32xf32> -> vector<8x32xf32>
    %cst_51 = arith.constant 1.000000e+00 : f32
    %78 = vector.broadcast %cst_51 : f32 to vector<8x1xf32>
    %79 = arith.divf %78, %76 : vector<8x1xf32>
    %80 = vector.broadcast %79 : vector<8x1xf32> to vector<8x32xf32>
    %81 = arith.mulf %77, %80 : vector<8x32xf32>
    %c0_52 = arith.constant 0 : index
    %c64_53 = arith.constant 64 : index
    %82 = vector.load %arg15[%c0_52, %c64_53] : memref<8x128xf32, #tpu.memory_space<vmem>>, vector<8x32xf32>
    tpu.vector_store %arg15[%c0_52, %c64_53], %81 {strides = array<i32>} : memref<8x128xf32, #tpu.memory_space<vmem>>, vector<8x32xf32>,
    %c0_54 = arith.constant 0 : index
    %c96 = arith.constant 96 : index
    %83 = vector.load %arg14[%c0_54, %c96] : memref<8x128xf32, #tpu.memory_space<vmem>>, vector<8x32xf32>
    %c0_55 = arith.constant 0 : index
    %c96_56 = arith.constant 96 : index
    %84 = vector.load %arg12[%c0_55, %c96_56] : memref<16x128xf32, #tpu.memory_space<vmem>>, vector<16x32xf32>
    %c0_57 = arith.constant 0 : index
    %c96_58 = arith.constant 96 : index
    %85 = vector.load %arg13[%c0_57, %c96_58] : memref<16x128xf32, #tpu.memory_space<vmem>>, vector<16x32xf32>
    %cst_59 = arith.constant dense<0.000000e+00> : vector<8x16xf32>
    %86 = tpu.matmul %83, %84, %cst_59 {dimension_numbers = #tpu.dot_dimension_numbers<[1], [1], [0], [0], [0, 0, 1, 0], [], []>} : vector<8x32xf32>, vector<16x32xf32>, vector<8x16xf32> -> vector<8x16xf32>
    %cst_60 = arith.constant dense<0xFF800000> : vector<8xf32>
    %87 = vector.multi_reduction <maximumf>, %86, %cst_60 [1] : vector<8x16xf32> to vector<8xf32>
    %88 = vector.shape_cast %87 : vector<8xf32> to vector<8x1xf32>
    %89 = vector.broadcast %88 : vector<8x1xf32> to vector<8x16xf32>
    %90 = arith.subf %86, %89 : vector<8x16xf32>
    %91 = math.exp %90 : vector<8x16xf32>
    %cst_61 = arith.constant dense<0.000000e+00> : vector<8xf32>
    %92 = vector.multi_reduction <add>, %91, %cst_61 [1] : vector<8x16xf32> to vector<8xf32>
    %93 = vector.shape_cast %92 : vector<8xf32> to vector<8x1xf32>
    %cst_62 = arith.constant dense<0.000000e+00> : vector<8x32xf32>
    %94 = tpu.matmul %91, %85, %cst_62 {dimension_numbers = #tpu.dot_dimension_numbers<[1], [0], [0], [1], [0, 0, 1, 1], [], []>} : vector<8x16xf32>, vector<16x32xf32>, vector<8x32xf32> -> vector<8x32xf32>
    %cst_63 = arith.constant 1.000000e+00 : f32
    %95 = vector.broadcast %cst_63 : f32 to vector<8x1xf32>
    %96 = arith.divf %95, %93 : vector<8x1xf32>
    %97 = vector.broadcast %96 : vector<8x1xf32> to vector<8x32xf32>
    %98 = arith.mulf %94, %97 : vector<8x32xf32>
    %c0_64 = arith.constant 0 : index
    %c96_65 = arith.constant 96 : index
    %99 = vector.load %arg15[%c0_64, %c96_65] : memref<8x128xf32, #tpu.memory_space<vmem>>, vector<8x32xf32>
    tpu.vector_store %arg15[%c0_64, %c96_65], %98 {strides = array<i32>} : memref<8x128xf32, #tpu.memory_space<vmem>>, vector<8x32xf32>,
    %c0_66 = arith.constant 0 : index
    %c0_67 = arith.constant 0 : index
    %100 = vector.load %arg15[%c0_66, %c0_67] : memref<8x128xf32, #tpu.memory_space<vmem>>, vector<8x128xf32>
    %c0_68 = arith.constant 0 : index
    %c0_69 = arith.constant 0 : index
    %101 = vector.load %arg9[%c0_68, %c0_69] : memref<128x32xf32, #tpu.memory_space<vmem>>, vector<128x32xf32>
    %cst_70 = arith.constant dense<0.000000e+00> : vector<8x32xf32>
    %102 = tpu.matmul %100, %101, %cst_70 {dimension_numbers = #tpu.dot_dimension_numbers<[1], [0], [0], [1], [0, 0, 1, 1], [], []>} : vector<8x128xf32>, vector<128x32xf32>, vector<8x32xf32> -> vector<8x32xf32>
    %c0_71 = arith.constant 0 : index
    %c0_72 = arith.constant 0 : index
    %103 = vector.load %arg10[%c0_71, %c0_72] : memref<1x32xf32, #tpu.memory_space<vmem>>, vector<1x32xf32>
    %104 = vector.broadcast %103 : vector<1x32xf32> to vector<8x32xf32>
    %105 = arith.addf %102, %104 : vector<8x32xf32>
    %c0_73 = arith.constant 0 : index
    %c0_74 = arith.constant 0 : index
    %c0_75 = arith.constant 0 : index
    %106 = vector.load %arg11[%c0_73, %c0_74, %c0_75] : memref<1x8x32xf32, #tpu.memory_space<vmem>>, vector<1x8x32xf32>
    %107 = vector.shape_cast %106 : vector<1x8x32xf32> to vector<8x32xf32>
    %108 = vector.shape_cast %105 : vector<8x32xf32> to vector<1x8x32xf32>
    tpu.vector_store %arg11[%c0_73, %c0_74, %c0_75], %108 {strides = array<i32>} : memref<1x8x32xf32, #tpu.memory_space<vmem>>, vector<1x8x32xf32>,
    return
  }
  func.func @transform_0(%arg0: i32, %arg1: i32) -> (i32, i32, i32) {
    %c0_i32 = arith.constant 0 : i32
    %c0_i32_0 = arith.constant 0 : i32
    return %arg0, %arg1, %c0_i32 : i32, i32, i32
  }
  func.func @transform_1(%arg0: i32, %arg1: i32) -> (i32, i32, i32) {
    %c0_i32 = arith.constant 0 : i32
    %c0_i32_0 = arith.constant 0 : i32
    %c0_i32_1 = arith.constant 0 : i32
    return %arg0, %c0_i32, %c0_i32_0 : i32, i32, i32
  }
  func.func @transform_2(%arg0: i32, %arg1: i32) -> (i32, i32) {
    %c0_i32 = arith.constant 0 : i32
    %c0_i32_0 = arith.constant 0 : i32
    %c0_i32_1 = arith.constant 0 : i32
    return %c0_i32, %c0_i32_0 : i32, i32
  }
  func.func @transform_3(%arg0: i32, %arg1: i32) -> (i32, i32) {
    %c0_i32 = arith.constant 0 : i32
    %c0_i32_0 = arith.constant 0 : i32
    %c0_i32_1 = arith.constant 0 : i32
    return %c0_i32, %c0_i32_0 : i32, i32
  }
  func.func @transform_4(%arg0: i32, %arg1: i32) -> (i32, i32) {
    %c0_i32 = arith.constant 0 : i32
    %c0_i32_0 = arith.constant 0 : i32
    %c0_i32_1 = arith.constant 0 : i32
    return %c0_i32, %c0_i32_0 : i32, i32
  }
  func.func @transform_5(%arg0: i32, %arg1: i32) -> (i32, i32) {
    %c0_i32 = arith.constant 0 : i32
    %c1_i32 = arith.constant 1 : i32
    %c0_i32_0 = arith.constant 0 : i32
    return %c0_i32, %c1_i32 : i32, i32
  }
  func.func @transform_6(%arg0: i32, %arg1: i32) -> (i32, i32) {
    %c0_i32 = arith.constant 0 : i32
    %c2_i32 = arith.constant 2 : i32
    %c0_i32_0 = arith.constant 0 : i32
    return %c0_i32, %c2_i32 : i32, i32
  }
  func.func @transform_7(%arg0: i32, %arg1: i32) -> (i32, i32) {
    %c0_i32 = arith.constant 0 : i32
    %c0_i32_0 = arith.constant 0 : i32
    %c0_i32_1 = arith.constant 0 : i32
    return %c0_i32, %c0_i32_0 : i32, i32
  }
  func.func @transform_8(%arg0: i32, %arg1: i32) -> (i32, i32) {
    %c0_i32 = arith.constant 0 : i32
    %c0_i32_0 = arith.constant 0 : i32
    %c0_i32_1 = arith.constant 0 : i32
    return %c0_i32, %c0_i32_0 : i32, i32
  }
  func.func @transform_9(%arg0: i32, %arg1: i32) -> (i32, i32, i32) {
    %c0_i32 = arith.constant 0 : i32
    %c0_i32_0 = arith.constant 0 : i32
    return %arg0, %arg1, %c0_i32 : i32, i32, i32
  }
}

</mosaic_0001>

<llo_original>
// kernel: tpu_custom_call.1
$region0: #{tpu_custom_call.1}
  #allocation0 [shape = 'u32[]', space=smem, size = 0x4, offset = 0x4, fixed_abs, tag = 'smem constant byte address 0x4 - core index']
  #allocation1 [shape = 'u32[144,128]{1,0:T(1,128)}', space=vmem, size = 0x12000, scoped, tag = 'internal scratch']
  #allocation2 [shape = 'f32[16,128]{1,0:T(8,128)}', space=vmem, size = 0x2000, scoped, tag = 'scratch operand']
  #allocation3 [shape = 'f32[16,128]{1,0:T(8,128)}', space=vmem, size = 0x2000, scoped, tag = 'scratch operand']
  #allocation4 [shape = 'f32[8,128]{1,0:T(8,128)}', space=vmem, size = 0x1000, scoped, tag = 'scratch operand']
  #allocation5 [shape = 'f32[8,128]{1,0:T(8,128)}', space=vmem, size = 0x1000, scoped, tag = 'scratch operand']
  %s0 = inlined_call_operand.vmem [shape: f32[2,8,32], index: 0, kind: input, shape index: {}]
  %s1 = inlined_call_operand.vmem [shape: f32[2,16,32], index: 1, kind: input, shape index: {}]
  %s2 = inlined_call_operand.vmem [shape: f32[1,32], index: 2, kind: input, shape index: {}]
  %s3 = inlined_call_operand.vmem [shape: f32[1,32], index: 3, kind: input, shape index: {}]
  %s4 = inlined_call_operand.vmem [shape: f32[32,128], index: 4, kind: input, shape index: {}]
  %s5 = inlined_call_operand.vmem [shape: f32[32,384], index: 5, kind: input, shape index: {}]
  %s6 = inlined_call_operand.hbm [shape: f32[32,384], index: 6, kind: input, shape index: {}]
  %s7 = inlined_call_operand.vmem [shape: f32[128,32], index: 7, kind: input, shape index: {}]
  %s8 = inlined_call_operand.vmem [shape: f32[1,32], index: 8, kind: input, shape index: {}]
  %s9 = inlined_call_operand.hbm [shape: f32[2,8,32], index: 9, kind: output, shape index: {}]
  %s10 = sld [smem:[#allocation0]]
  $region115: #{tpu_custom_call.1} parent=0
    _
  %s12 = ssub.s32 1, %s10
  %s13 = scalar_select 0, %s12, %s10
  $region1: #{tpu_custom_call.1} parent=0
    #allocation6 [shape = 'u8[16384]{0}', space=vmem, size = 0x4000, scoped, tag = 'input window, operand 5, single buffered']
    #allocation7 [shape = 'u8[16384]{0}', space=vmem, size = 0x4000, scoped, tag = 'input window, operand 6, single buffered']
    #allocation8 [shape = 's32[2]{0}', space=sflag, size = 0x8, scoped, tag = 'scoped memory for tpu_custom_call.1']
    #allocation9 [shape = 's32[2]{0}', space=sflag, size = 0x8, scoped, tag = 'scoped memory for tpu_custom_call.1']
    #allocation10 [shape = 'u8[8192]{0}', space=vmem, size = 0x2000, scoped, tag = 'output window, operand 0']
    %14 = vsyncpa [#allocation8], 0
    %15 = vsyncpa [#allocation9], 0
    %s16 = scalar_lea.sflag [#allocation9], 1
    %17 = vsyncpa %s16, 0
    loop: start=0, step=1, limit=4
    $region2: #{tpu_custom_call.1} parent=1 // loop_pre_header
      _
    $region3: #{tpu_custom_call.1} parent=1 // loop_header
      %s19 = sphi 0, %s23
      %p20 = scmp.ge.s32.totalorder %s19, 4
      %s26 = sphi 0, %s38
      %s27 = sphi 0, %s34
      %s28 = sphi 0, %s26
      %s29 = sphi 0, %s27
      %s30 = sphi 0, %s28
      %s31 = sphi 0, %s29
      %s43 = sphi 0, %s45
      %s46 = sphi 0, %s43
      %s47 = sphi 0, %s46
      %s63 = sphi 0, %s47
      %s69 = sphi 0, %s71
      %s72 = sphi 0, %s69
      %s73 = sphi 0, %s72
      %s89 = sphi 0, %s73
      %s93 = sphi 0, %s93
      %s95 = sphi 0, %s93
      %s96 = sphi 0, %s95
      %s110 = sphi 0, %s96
      %s114 = sphi 0, %s114
      %s116 = sphi 0, %s114
      %s117 = sphi 0, %s116
      %s131 = sphi 0, %s117
      %s135 = sphi 0, %s135
      %s137 = sphi 0, %s135
      %s138 = sphi 0, %s137
      %s152 = sphi 0, %s138
      %s156 = sphi 0, %s156
      %s158 = sphi 0, %s156
      %s159 = sphi 0, %s158
      %s173 = sphi 0, %s159
      %s177 = sphi 0, %s177
      %s179 = sphi 0, %s177
      %s180 = sphi 0, %s179
      %s194 = sphi 0, %s180
      %s198 = sphi 0, %s198
      %s200 = sphi 0, %s198
      %s201 = sphi 0, %s200
      %s215 = sphi 0, %s201
      %s219 = sphi 0, %s219
      %s221 = sphi 0, %s219
      %s222 = sphi 0, %s221
      %s236 = sphi 0, %s222
      %s244 = sphi 0, %s246
      %s247 = sphi 0, %s244
      %s248 = sphi 0, %s247
      %s264 = sphi 0, %s248
    $region4: #{tpu_custom_call.1} parent=1 // loop_header_branch
      %22 = sbr.rel (%p20) target = $region8
    $region5: #{tpu_custom_call.1} parent=1 // loop_body
      %s24 = ssub.s32 %s19, 1
      %s25 = ssub.s32 %s19, 2
      %s32 = sadd.s32 1, %s27
      %p33 = scmp.ge.s32.totalorder %s32, 1
      %s34 = scalar_select %p33, 0, %s32
      %s35 = sadd.s32 1, %s26
      %s36 = scalar_select %p33, %s35, %s26
      %p37 = scmp.ge.s32.totalorder %s36, 2
      %s38 = scalar_select %p37, 0, %s36
      %s39 = ssub.s32 %s26, %s38
      %s40 = ssub.s32 %s27, %s34
      %s41 = sor.u32 %s39, %s40
      %p42 = scmp.eq.s32.totalorder %s41, 0
      %s44 = sadd.s32 %s43, 1
      %s45 = scalar_select %p42, %s43, %s44
      %p48 = pneg %p42
      %p49 = scmp.eq.s32.totalorder %s19, 1
      %p50 = por %p48, %p49
      %p51 = scmp.ne.s32.totalorder %s43, %s46
      %p52 = scmp.eq.s32.totalorder %s19, 0
      %p53 = por %p51, %p52
      %p54 = scmp.ne.s32.totalorder %s43, %s46
      %p55 = scmp.eq.s32.totalorder %s24, 1
      %p56 = por %p54, %p55
      %p57 = scmp.ne.s32.totalorder %s46, %s47
      %p58 = scmp.eq.s32.totalorder %s24, 0
      %p59 = por %p57, %p58
      %p60 = scmp.ne.s32.totalorder %s46, %s47
      %p61 = scmp.eq.s32.totalorder %s25, 1
      %p62 = por %p60, %p61
      %p64 = scmp.ne.s32.totalorder %s47, %s63
      %p65 = scmp.eq.s32.totalorder %s25, 0
      %p66 = por %p64, %p65
      %s67 = ssub.s32 %s26, %s38
      %p68 = scmp.eq.s32.totalorder %s67, 0
      %s70 = sadd.s32 %s69, 1
      %s71 = scalar_select %p68, %s69, %s70
      %p74 = pneg %p68
      %p75 = scmp.eq.s32.totalorder %s19, 1
      %p76 = por %p74, %p75
      %p77 = scmp.ne.s32.totalorder %s69, %s72
      %p78 = scmp.eq.s32.totalorder %s19, 0
      %p79 = por %p77, %p78
      %p80 = scmp.ne.s32.totalorder %s69, %s72
      %p81 = scmp.eq.s32.totalorder %s24, 1
      %p82 = por %p80, %p81
      %p83 = scmp.ne.s32.totalorder %s72, %s73
      %p84 = scmp.eq.s32.totalorder %s24, 0
      %p85 = por %p83, %p84
      %p86 = scmp.ne.s32.totalorder %s72, %s73
      %p87 = scmp.eq.s32.totalorder %s25, 1
      %p88 = por %p86, %p87
      %p90 = scmp.ne.s32.totalorder %s73, %s89
      %p91 = scmp.eq.s32.totalorder %s25, 0
      %p92 = por %p90, %p91
      %s94 = sadd.s32 %s93, 1
      %p97 = scmp.eq.s32.totalorder %s19, 1
      %p98 = scmp.ne.s32.totalorder %s93, %s95
      %p99 = scmp.eq.s32.totalorder %s19, 0
      %p100 = por %p98, %p99
      %p101 = scmp.ne.s32.totalorder %s93, %s95
      %p102 = scmp.eq.s32.totalorder %s24, 1
      %p103 = por %p101, %p102
      %p104 = scmp.ne.s32.totalorder %s95, %s96
      %p105 = scmp.eq.s32.totalorder %s24, 0
      %p106 = por %p104, %p105
      %p107 = scmp.ne.s32.totalorder %s95, %s96
      %p108 = scmp.eq.s32.totalorder %s25, 1
      %p109 = por %p107, %p108
      %p111 = scmp.ne.s32.totalorder %s96, %s110
      %p112 = scmp.eq.s32.totalorder %s25, 0
      %p113 = por %p111, %p112
      %s115 = sadd.s32 %s114, 1
      %p118 = scmp.eq.s32.totalorder %s19, 1
      %p119 = scmp.ne.s32.totalorder %s114, %s116
      %p120 = scmp.eq.s32.totalorder %s19, 0
      %p121 = por %p119, %p120
      %p122 = scmp.ne.s32.totalorder %s114, %s116
      %p123 = scmp.eq.s32.totalorder %s24, 1
      %p124 = por %p122, %p123
      %p125 = scmp.ne.s32.totalorder %s116, %s117
      %p126 = scmp.eq.s32.totalorder %s24, 0
      %p127 = por %p125, %p126
      %p128 = scmp.ne.s32.totalorder %s116, %s117
      %p129 = scmp.eq.s32.totalorder %s25, 1
      %p130 = por %p128, %p129
      %p132 = scmp.ne.s32.totalorder %s117, %s131
      %p133 = scmp.eq.s32.totalorder %s25, 0
      %p134 = por %p132, %p133
      %s136 = sadd.s32 %s135, 1
      %p139 = scmp.eq.s32.totalorder %s19, 1
      %p140 = scmp.ne.s32.totalorder %s135, %s137
      %p141 = scmp.eq.s32.totalorder %s19, 0
      %p142 = por %p140, %p141
      %p143 = scmp.ne.s32.totalorder %s135, %s137
      %p144 = scmp.eq.s32.totalorder %s24, 1
      %p145 = por %p143, %p144
      %p146 = scmp.ne.s32.totalorder %s137, %s138
      %p147 = scmp.eq.s32.totalorder %s24, 0
      %p148 = por %p146, %p147
      %p149 = scmp.ne.s32.totalorder %s137, %s138
      %p150 = scmp.eq.s32.totalorder %s25, 1
      %p151 = por %p149, %p150
      %p153 = scmp.ne.s32.totalorder %s138, %s152
      %p154 = scmp.eq.s32.totalorder %s25, 0
      %p155 = por %p153, %p154
      %s157 = sadd.s32 %s156, 1
      %p160 = scmp.eq.s32.totalorder %s19, 1
      %p161 = scmp.ne.s32.totalorder %s156, %s158
      %p162 = scmp.eq.s32.totalorder %s19, 0
      %p163 = por %p161, %p162
      %p164 = scmp.ne.s32.totalorder %s156, %s158
      %p165 = scmp.eq.s32.totalorder %s24, 1
      %p166 = por %p164, %p165
      %p167 = scmp.ne.s32.totalorder %s158, %s159
      %p168 = scmp.eq.s32.totalorder %s24, 0
      %p169 = por %p167, %p168
      %p170 = scmp.ne.s32.totalorder %s158, %s159
      %p171 = scmp.eq.s32.totalorder %s25, 1
      %p172 = por %p170, %p171
      %p174 = scmp.ne.s32.totalorder %s159, %s173
      %p175 = scmp.eq.s32.totalorder %s25, 0
      %p176 = por %p174, %p175
      %s178 = sadd.s32 %s177, 1
      %p181 = scmp.eq.s32.totalorder %s19, 1
      %p182 = scmp.ne.s32.totalorder %s177, %s179
      %p183 = scmp.eq.s32.totalorder %s19, 0
      %p184 = por %p182, %p183
      %p185 = scmp.ne.s32.totalorder %s177, %s179
      %p186 = scmp.eq.s32.totalorder %s24, 1
      %p187 = por %p185, %p186
      %p188 = scmp.ne.s32.totalorder %s179, %s180
      %p189 = scmp.eq.s32.totalorder %s24, 0
      %p190 = por %p188, %p189
      %p191 = scmp.ne.s32.totalorder %s179, %s180
      %p192 = scmp.eq.s32.totalorder %s25, 1
      %p193 = por %p191, %p192
      %p195 = scmp.ne.s32.totalorder %s180, %s194
      %p196 = scmp.eq.s32.totalorder %s25, 0
      %p197 = por %p195, %p196
      %s199 = sadd.s32 %s198, 1
      %p202 = scmp.eq.s32.totalorder %s19, 1
      %p203 = scmp.ne.s32.totalorder %s198, %s200
      %p204 = scmp.eq.s32.totalorder %s19, 0
      %p205 = por %p203, %p204
      %p206 = scmp.ne.s32.totalorder %s198, %s200
      %p207 = scmp.eq.s32.totalorder %s24, 1
      %p208 = por %p206, %p207
      %p209 = scmp.ne.s32.totalorder %s200, %s201
      %p210 = scmp.eq.s32.totalorder %s24, 0
      %p211 = por %p209, %p210
      %p212 = scmp.ne.s32.totalorder %s200, %s201
      %p213 = scmp.eq.s32.totalorder %s25, 1
      %p214 = por %p212, %p213
      %p216 = scmp.ne.s32.totalorder %s201, %s215
      %p217 = scmp.eq.s32.totalorder %s25, 0
      %p218 = por %p216, %p217
      %s220 = sadd.s32 %s219, 1
      %p223 = scmp.eq.s32.totalorder %s19, 1
      %p224 = scmp.ne.s32.totalorder %s219, %s221
      %p225 = scmp.eq.s32.totalorder %s19, 0
      %p226 = por %p224, %p225
      %p227 = scmp.ne.s32.totalorder %s219, %s221
      %p228 = scmp.eq.s32.totalorder %s24, 1
      %p229 = por %p227, %p228
      %p230 = scmp.ne.s32.totalorder %s221, %s222
      %p231 = scmp.eq.s32.totalorder %s24, 0
      %p232 = por %p230, %p231
      %p233 = scmp.ne.s32.totalorder %s221, %s222
      %p234 = scmp.eq.s32.totalorder %s25, 1
      %p235 = por %p233, %p234
      %p237 = scmp.ne.s32.totalorder %s222, %s236
      %p238 = scmp.eq.s32.totalorder %s25, 0
      %p239 = por %p237, %p238
      %s240 = ssub.s32 %s26, %s38
      %s241 = ssub.s32 %s27, %s34
      %s242 = sor.u32 %s240, %s241
      %p243 = scmp.eq.s32.totalorder %s242, 0
      %s245 = sadd.s32 %s244, 1
      %s246 = scalar_select %p243, %s244, %s245
      %p249 = pneg %p243
      %p250 = scmp.eq.s32.totalorder %s19, 1
      %p251 = por %p249, %p250
      %p252 = scmp.ne.s32.totalorder %s244, %s247
      %p253 = scmp.eq.s32.totalorder %s19, 0
      %p254 = por %p252, %p253
      %p255 = scmp.ne.s32.totalorder %s244, %s247
      %p256 = scmp.eq.s32.totalorder %s24, 1
      %p257 = por %p255, %p256
      %p258 = scmp.ne.s32.totalorder %s247, %s248
      %p259 = scmp.eq.s32.totalorder %s24, 0
      %p260 = por %p258, %p259
      %p261 = scmp.ne.s32.totalorder %s247, %s248
      %p262 = scmp.eq.s32.totalorder %s25, 1
      %p263 = por %p261, %p262
      %p265 = scmp.ne.s32.totalorder %s248, %s264
      %p266 = scmp.eq.s32.totalorder %s25, 0
      %p267 = por %p265, %p266
      %p268 = scmp.le.s32.totalorder 1, %s19
      %p269 = scmp.lt.s32.totalorder %s19, 3
      %p270 = pnand %p268, %p269
      %p271 = pneg %p270
      // Predicated region
      $region9: #{tpu_custom_call.1} parent=5 // pred_check
        _
      $region10: #{tpu_custom_call.1} parent=5 // pred_check_branch
        %273 = sbr.rel (%p270) target = $region12
      $region11: #{tpu_custom_call.1} parent=5 // pred_region
        %s274 = ssub.s32 %s19, 1
        // Predicated region
        $region13: #{tpu_custom_call.1} parent=11 // pred_check
          %p275 = pneg %p106
        $region14: #{tpu_custom_call.1} parent=11 // pred_check_branch
          %277 = sbr.rel (%p275) target = $region16
        $region15: #{tpu_custom_call.1} parent=11 // pred_region
          _
        $region16: #{tpu_custom_call.1} parent=11 // pred_fallthru
          _
        // Predicated region
        $region17: #{tpu_custom_call.1} parent=11 // pred_check
          %p278 = pneg %p127
        $region18: #{tpu_custom_call.1} parent=11 // pred_check_branch
          %280 = sbr.rel (%p278) target = $region20
        $region19: #{tpu_custom_call.1} parent=11 // pred_region
          _
        $region20: #{tpu_custom_call.1} parent=11 // pred_fallthru
          _
        // Predicated region
        $region21: #{tpu_custom_call.1} parent=11 // pred_check
          %p281 = pneg %p148
        $region22: #{tpu_custom_call.1} parent=11 // pred_check_branch
          %283 = sbr.rel (%p281) target = $region24
        $region23: #{tpu_custom_call.1} parent=11 // pred_region
          _
        $region24: #{tpu_custom_call.1} parent=11 // pred_fallthru
          _
        // Predicated region
        $region25: #{tpu_custom_call.1} parent=11 // pred_check
          %p284 = pneg %p169
        $region26: #{tpu_custom_call.1} parent=11 // pred_check_branch
          %286 = sbr.rel (%p284) target = $region28
        $region27: #{tpu_custom_call.1} parent=11 // pred_region
          %s287 = scalar_lea.vmem %s5, 8
          // Predicated region
          $region29: #{tpu_custom_call.1} parent=27 // pred_check
            _
          $region30: #{tpu_custom_call.1} parent=27 // pred_check_branch
            %289 = sbr.rel (0) target = $region32
          $region31: #{tpu_custom_call.1} parent=27 // pred_region
            // Predicated region
            $region33: #{tpu_custom_call.1} parent=31 // pred_check
              _
            $region34: #{tpu_custom_call.1} parent=31 // pred_check_branch
              %291 = sbr.rel (0) target = $region36
            $region35: #{tpu_custom_call.1} parent=31 // pred_region
              // Predicated region
              $region48: #{tpu_custom_call.1} parent=35 // pred_check
                _
              $region49: #{tpu_custom_call.1} parent=35 // pred_check_branch
                %312 = sbr.rel (0) target = $region51
              $region50: #{tpu_custom_call.1} parent=35 // pred_region
                loop: start=0, step=1, limit=1
                $region52: #{tpu_custom_call.1} parent=50 // loop_pre_header
                  _
                $region53: #{tpu_custom_call.1} parent=50 // loop_header
                  %s314 = sphi 0, %s318
                  %p315 = scmp.ge.s32.totalorder %s314, 1
                  %s319 = sphi %s287, %s287
                  %s320 = sphi [#allocation6], [#allocation6]
                $region54: #{tpu_custom_call.1} parent=50 // loop_header_branch
                  %317 = sbr.rel (%p315) target = $region58
                $region55: #{tpu_custom_call.1} parent=50 // loop_body
                  %v321 = vld [vmem:[%s319] sm:$0xff]
                  %322 = vst [vmem:[%s320] sm:$0xff] %v321
                  %v323 = vld [vmem:[%s319 + $0x18] sm:$0xff]
                  %324 = vst [vmem:[%s320 + $0x8] sm:$0xff] %v323
                  %v325 = vld [vmem:[%s319 + $0x30] sm:$0xff]
                  %326 = vst [vmem:[%s320 + $0x10] sm:$0xff] %v325
                  %v327 = vld [vmem:[%s319 + $0x48] sm:$0xff]
                  %328 = vst [vmem:[%s320 + $0x18] sm:$0xff] %v327
                $region56: #{tpu_custom_call.1} parent=50 // loop_footer
                  %s318 = sadd.s32 1, %s314
                $region57: #{tpu_custom_call.1} parent=50 // loop_footer_branch
                  %313 = sbr.rel target = $region53
                $region58: #{tpu_custom_call.1} parent=50 // loop_exit
                  _
              $region51: #{tpu_custom_call.1} parent=35 // pred_fallthru
                _
              // Predicated region
              $region59: #{tpu_custom_call.1} parent=35 // pred_check
                _
              $region60: #{tpu_custom_call.1} parent=35 // pred_check_branch
                %330 = sbr.rel target = $region62
              $region61: #{tpu_custom_call.1} parent=35 // pred_region
                _
              $region62: #{tpu_custom_call.1} parent=35 // pred_fallthru
                _
            $region36: #{tpu_custom_call.1} parent=31 // pred_fallthru
              _
            // Predicated region
            $region37: #{tpu_custom_call.1} parent=31 // pred_check
              _
            $region38: #{tpu_custom_call.1} parent=31 // pred_check_branch
              %293 = sbr.rel target = $region40
            $region39: #{tpu_custom_call.1} parent=31 // pred_region
              loop: start=0, step=1, limit=1
              $region41: #{tpu_custom_call.1} parent=39 // loop_pre_header
                _
              $region42: #{tpu_custom_call.1} parent=39 // loop_header
                %s296 = sphi 0, %s300
                %p297 = scmp.ge.s32.totalorder %s296, 1
                %s301 = sphi %s287, %s287
                %s302 = sphi [#allocation6], [#allocation6]
              $region43: #{tpu_custom_call.1} parent=39 // loop_header_branch
                %299 = sbr.rel (%p297) target = $region47
              $region44: #{tpu_custom_call.1} parent=39 // loop_body
                %v303 = vld [vmem:[%s301] sm:$0xff]
                %304 = vst [vmem:[%s302] sm:$0xff] %v303
                %v305 = vld [vmem:[%s301 + $0x18] sm:$0xff]
                %306 = vst [vmem:[%s302 + $0x8] sm:$0xff] %v305
                %v307 = vld [vmem:[%s301 + $0x30] sm:$0xff]
                %308 = vst [vmem:[%s302 + $0x10] sm:$0xff] %v307
                %v309 = vld [vmem:[%s301 + $0x48] sm:$0xff]
                %310 = vst [vmem:[%s302 + $0x18] sm:$0xff] %v309
              $region45: #{tpu_custom_call.1} parent=39 // loop_footer
                %s300 = sadd.s32 1, %s296
              $region46: #{tpu_custom_call.1} parent=39 // loop_footer_branch
                %295 = sbr.rel target = $region42
              $region47: #{tpu_custom_call.1} parent=39 // loop_exit
                _
            $region40: #{tpu_custom_call.1} parent=31 // pred_fallthru
              _
          $region32: #{tpu_custom_call.1} parent=27 // pred_fallthru
            _
          %331 = vnop
        $region28: #{tpu_custom_call.1} parent=11 // pred_fallthru
          _
        // Predicated region
        $region63: #{tpu_custom_call.1} parent=11 // pred_check
          %p332 = pneg %p190
        $region64: #{tpu_custom_call.1} parent=11 // pred_check_branch
          %334 = sbr.rel (%p332) target = $region66
        $region65: #{tpu_custom_call.1} parent=11 // pred_region
          %s336 = ssub.s32 512, 512
          %337 = vsyncadd [#allocation8], %s336
          %s338 = scalar_lea.hbm %s6, 256
          %s339 = sshll.u32 [#allocation7], 4
          %s340 = int_to_ptr.vmem [resolvable:$true] %s339
          %345 = dma.hbm_to_vmem [thread:$0]  %s338, 512, %s340, [#allocation8], 384, 128, 8
        $region66: #{tpu_custom_call.1} parent=11 // pred_fallthru
          _
        // Predicated region
        $region67: #{tpu_custom_call.1} parent=11 // pred_check
          %p346 = pneg %p211
        $region68: #{tpu_custom_call.1} parent=11 // pred_check_branch
          %348 = sbr.rel (%p346) target = $region70
        $region69: #{tpu_custom_call.1} parent=11 // pred_region
          _
        $region70: #{tpu_custom_call.1} parent=11 // pred_fallthru
          _
        // Predicated region
        $region71: #{tpu_custom_call.1} parent=11 // pred_check
          %p349 = pneg %p232
        $region72: #{tpu_custom_call.1} parent=11 // pred_check_branch
          %351 = sbr.rel (%p349) target = $region74
        $region73: #{tpu_custom_call.1} parent=11 // pred_region
          _
        $region74: #{tpu_custom_call.1} parent=11 // pred_fallthru
          _
      $region12: #{tpu_custom_call.1} parent=5 // pred_fallthru
        _
      %p352 = scmp.lt.s32.totalorder %s19, 2
      // Predicated region
      $region75: #{tpu_custom_call.1} parent=5 // pred_check
        %p353 = pneg %p352
      $region76: #{tpu_custom_call.1} parent=5 // pred_check_branch
        %355 = sbr.rel (%p353) target = $region78
      $region77: #{tpu_custom_call.1} parent=5 // pred_region
        // Predicated region
        $region79: #{tpu_custom_call.1} parent=77 // pred_check
          %p356 = pneg %p53
        $region80: #{tpu_custom_call.1} parent=77 // pred_check_branch
          %358 = sbr.rel (%p356) target = $region82
        $region81: #{tpu_custom_call.1} parent=77 // pred_region
          %p359 = scmp.lt.s32.totalorder %s26, 1
          %s360 = scalar_select %p359, %s26, 1
          %p361 = scmp.lt.s32.totalorder %s27, 0
          %s362 = scalar_select %p361, %s27, 0
          %s363 = sadd.s32 %s362, %s360
          %s364 = smul.addr %s363, 8
          %s365 = scalar_lea.vmem %s0, %s364
        $region82: #{tpu_custom_call.1} parent=77 // pred_fallthru
          _
        // Predicated region
        $region83: #{tpu_custom_call.1} parent=77 // pred_check
          %p366 = pneg %p79
        $region84: #{tpu_custom_call.1} parent=77 // pred_check_branch
          %368 = sbr.rel (%p366) target = $region86
        $region85: #{tpu_custom_call.1} parent=77 // pred_region
          %p369 = scmp.lt.s32.totalorder %s26, 1
          %s370 = scalar_select %p369, %s26, 1
          %s371 = smul.addr %s370, 2
          %s372 = smul.addr %s371, 8
          %s373 = scalar_lea.vmem %s1, %s372
        $region86: #{tpu_custom_call.1} parent=77 // pred_fallthru
          _
      $region78: #{tpu_custom_call.1} parent=5 // pred_fallthru
        _
      %p374 = scmp.le.s32.totalorder 1, %s19
      %p375 = scmp.lt.s32.totalorder %s19, 3
      %p376 = pnand %p374, %p375
      %p377 = pneg %p376
      // Predicated region
      $region87: #{tpu_custom_call.1} parent=5 // pred_check
        _
      $region88: #{tpu_custom_call.1} parent=5 // pred_check_branch
        %379 = sbr.rel (%p376) target = $region90
      $region89: #{tpu_custom_call.1} parent=5 // pred_region
        %s380 = ssub.s32 %s19, 1
        // Predicated region
        $region91: #{tpu_custom_call.1} parent=89 // pred_check
          %p381 = pneg %p169
        $region92: #{tpu_custom_call.1} parent=89 // pred_check_branch
          %383 = sbr.rel (%p381) target = $region94
        $region93: #{tpu_custom_call.1} parent=89 // pred_region
          _
        $region94: #{tpu_custom_call.1} parent=89 // pred_fallthru
          _
        // Predicated region
        $region95: #{tpu_custom_call.1} parent=89 // pred_check
          %p384 = pneg %p190
        $region96: #{tpu_custom_call.1} parent=89 // pred_check_branch
          %386 = sbr.rel (%p384) target = $region98
        $region97: #{tpu_custom_call.1} parent=89 // pred_region
          %387 = dma.done [#allocation8], 512
        $region98: #{tpu_custom_call.1} parent=89 // pred_fallthru
          _
        %p388 = scmp.lt.s32.totalorder %s28, 1
        %s389 = scalar_select %p388, %s28, 1
        %p390 = scmp.lt.s32.totalorder %s29, 0
        %s391 = scalar_select %p390, %s29, 0
        %s392 = sadd.s32 %s391, %s389
        %s393 = smul.addr %s392, 8
        %s394 = scalar_lea.vmem %s0, %s393
        %p395 = pneg %p59
        %p396 = pneg %p56
        %p397 = scmp.lt.s32.totalorder %s28, 1
        %s398 = scalar_select %p397, %s28, 1
        %s399 = smul.addr %s398, 2
        %s400 = smul.addr %s399, 8
        %s401 = scalar_lea.vmem %s1, %s400
        %p402 = pneg %p85
        %p403 = pneg %p82
        %p404 = pneg %p106
        %p405 = pneg %p103
        %p406 = pneg %p127
        %p407 = pneg %p124
        %p408 = pneg %p148
        %p409 = pneg %p145
        %p410 = pneg %p169
        %p411 = pneg %p166
        %p412 = pneg %p190
        %p413 = pneg %p187
        %p414 = pneg %p211
        %p415 = pneg %p208
        %p416 = pneg %p232
        %p417 = pneg %p229
        %p418 = pneg %p260
        %p419 = pneg %p257
        %s420 = sand.u32 %s247, 1
        %s421 = scalar_lea.sflag [#allocation9], %s420
        %s422 = sand.u32 %s247, 1
        %s423 = smul.addr %s422, 8
        %s424 = scalar_lea.vmem [#allocation10], %s423
        %p425 = scmp.lt.s32.totalorder %s28, 1
        %s426 = scalar_select %p425, %s28, 1
        %p427 = scmp.lt.s32.totalorder %s29, 0
        %s428 = scalar_select %p427, %s29, 0
        %s429 = sadd.s32 %s428, %s426
        %s430 = smul.addr %s429, 8
        %s431 = scalar_lea.vmem %s0, %s430
        %p432 = scmp.lt.s32.totalorder %s28, 1
        %s433 = scalar_select %p432, %s28, 1
        %s434 = smul.addr %s433, 2
        %s435 = smul.addr %s434, 8
        %s436 = scalar_lea.vmem %s1, %s435
        %v437 = vld [vmem:[%s2] sm:$0x1]
        %v438 = vld [vmem:[%s3] sm:$0x1]
        %p439 = scmp.eq.s32.totalorder %s29, 0
        // Predicated region
        $region99: #{tpu_custom_call.1} parent=89 // pred_check
          %p440 = pneg %p439
        $region100: #{tpu_custom_call.1} parent=89 // pred_check_branch
          %442 = sbr.rel (%p440) target = $region102
        $region101: #{tpu_custom_call.1} parent=89 // pred_region
          %v443 = vld [vmem:[%s436] sm:$0xff]
          %v444 = vld [vmem:[%s436 + $0x8] sm:$0xff]
          %vm445 = vcmask 261120
          %v446 = vsel %vm445, %v443, 0.0
          %447 = vadd.xlane.f32.xlu0 %v446
          %v448 = vpop.xlane.xlu0 %447
          %v449 = vsel %vm445, %v444, 0.0
          %450 = vadd.xlane.f32.xlu0 %v449
          %v451 = vpop.xlane.xlu0 %450
          %v452 = vrcp.pop 32.0
          %v453 = vmul.f32 %v448, %v452
          %v454 = vmul.f32 %v451, %v452
          %v455 = vsub.f32 %v443, %v453
          %v456 = vsub.f32 %v444, %v454
          %v457 = vmul.f32 %v455, %v455
          %v458 = vmul.f32 %v456, %v456
          %v459 = vsel %vm445, %v457, 0.0
          %460 = vadd.xlane.f32.xlu0 %v459
          %v461 = vpop.xlane.xlu0 %460
          %v462 = vsel %vm445, %v458, 0.0
          %463 = vadd.xlane.f32.xlu0 %v462
          %v464 = vpop.xlane.xlu0 %463
          %v465 = vmul.f32 %v461, %v452
          %v466 = vmul.f32 %v464, %v452
          %v467 = vadd.f32 %v465, 1e-05
          %v468 = vadd.f32 %v466, 1e-05
          %v469 = vrsqrt.pop %v467
          %v470 = vrsqrt.pop %v468
          %v471 = vmul.f32 %v455, %v469
          %v472 = vmul.f32 %v456, %v470
          %v474 = vlaneseq
          %v475 = vshrl.u32 %v474, 7
          %v476 = vsub.s32 0, %v475
          %v477 = vrot.slane %v437, %v476
          %v479 = vmul.f32 %v471, %v477
          %v480 = vmul.f32 %v472, %v477
          %v482 = vlaneseq
          %v483 = vshrl.u32 %v482, 7
          %v484 = vsub.s32 0, %v483
          %v485 = vrot.slane %v438, %v484
          %v487 = vadd.f32 %v479, %v485
          %v488 = vadd.f32 %v480, %v485
          %v489 = vld [vmem:[#allocation6] sm:$0xff]
          %v490 = vld [vmem:[#allocation6 + $0x8] sm:$0xff]
          %v491 = vld [vmem:[#allocation6 + $0x10] sm:$0xff]
          %v492 = vld [vmem:[#allocation6 + $0x18] sm:$0xff]
          %v494 = vsel %vm445, %v487, 0
          %v497 = vsel %vm445, %v488, 0
          %499 = vmatprep.subr.mxu0 0.0
          %500 = vmatpush1.msra.mxu0 %v489
          %501 = vmatprep.subr.mxu0 0.0
          %502 = vmatpush1.msra.mxu0 %v490
          %503 = vmatprep.subr.mxu0 0.0
          %504 = vmatpush1.msra.mxu0 %v491
          %505 = vmatprep.subr.mxu0 0.0
          %506 = vmatpush1.msra.mxu0 %v492
          %507 = vmatprep.subr.mxu0 0.0
          %508 = vmatpush1.msra.mxu0 0.0
          %509 = vmatprep.subr.mxu0 0.0
          %510 = vmatpush1.msra.mxu0 0.0
          %511 = vmatprep.subr.mxu0 0.0
          %512 = vmatpush1.msra.mxu0 0.0
          %513 = vmatprep.subr.mxu0 0.0
          %514 = vmatpush1.msra.mxu0 0.0
          %515 = vmatprep.subr.mxu0 0.0
          %516 = vmatpush1.msra.mxu0 0.0
          %517 = vmatprep.subr.mxu0 0.0
          %518 = vmatpush1.msra.mxu0 0.0
          %519 = vmatprep.subr.mxu0 0.0
          %520 = vmatpush1.msra.mxu0 0.0
          %521 = vmatprep.subr.mxu0 0.0
          %522 = vmatpush1.msra.mxu0 0.0
          %523 = vmatprep.subr.mxu0 0.0
          %524 = vmatpush1.msra.mxu0 0.0
          %525 = vmatprep.subr.mxu0 0.0
          %526 = vmatpush1.msra.mxu0 0.0
          %527 = vmatprep.subr.mxu0 0.0
          %528 = vmatpush1.msra.mxu0 0.0
          %529 = vmatprep.subr.mxu0 0.0
          %530 = vmatpush1.msra.mxu0 0.0
          %531 = vmatprep.subr.mxu0 0.0
          %532 = vmatpush1.msra.mxu0 0.0
          %533 = vmatprep.subr.mxu0 0.0
          %534 = vmatpush1.msra.mxu0 0.0
          %535 = vmatprep.subr.mxu0 0.0
          %536 = vmatpush1.msra.mxu0 0.0
          %537 = vmatprep.subr.mxu0 0.0
          %538 = vmatpush1.msra.mxu0 0.0
          %539 = vmatprep.subr.mxu0 0.0
          %540 = vmatpush1.msra.mxu0 0.0
          %541 = vmatprep.subr.mxu0 0.0
          %542 = vmatpush1.msra.mxu0 0.0
          %543 = vmatprep.subr.mxu0 0.0
          %544 = vmatpush1.msra.mxu0 0.0
          %545 = vmatprep.subr.mxu0 0.0
          %546 = vmatpush1.msra.mxu0 0.0
          %547 = vmatprep.subr.mxu0 0.0
          %548 = vmatpush1.msra.mxu0 0.0
          %549 = vmatprep.subr.mxu0 0.0
          %550 = vmatpush1.msra.mxu0 0.0
          %551 = vmatprep.subr.mxu0 0.0
          %552 = vmatpush1.msra.mxu0 0.0
          %553 = vmatprep.subr.mxu0 0.0
          %554 = vmatpush1.msra.mxu0 0.0
          %555 = vmatprep.subr.mxu0 0.0
          %556 = vmatpush1.msra.mxu0 0.0
          %557 = vmatprep.subr.mxu0 0.0
          %558 = vmatpush1.msra.mxu0 0.0
          %559 = vmatprep.subr.mxu0 0.0
          %560 = vmatpush1.msra.mxu0 0.0
          %561 = vmatprep.subr.mxu0 0.0
          %562 = vmatpush1.msra.mxu0 0.0
          %563 = vmatprep.mubr.f32.mxu0 0.0
          %564 = vmatmul.mubr.f32.gmra.mrb[0].mxu0 %v494
          %v565 = vpop.f32.mrb[0].mxu0
          %v566 = vadd.f32 0.0, %v565
          %v567 = vpop.f32.mrb[0].mxu0
          %568 = vmatprep.mubr.f32.mxu0 0.0
          %569 = vmatmul.mubr.f32.gmra.mrb[0].mxu0 %v497
          %v570 = vpop.f32.mrb[0].mxu0
          %v571 = vadd.f32 0.0, %v570
          %v572 = vpop.f32.mrb[0].mxu0
          %573 = vdwg.mxu0
          %574 = vst [vmem:[#allocation2] sm:$0xff] %v566
          %575 = vst [vmem:[#allocation2 + $0x8] sm:$0xff] %v571
          %v576 = vld [vmem:[#allocation7] sm:$0xff]
          %v577 = vld [vmem:[#allocation7 + $0x8] sm:$0xff]
          %v578 = vld [vmem:[#allocation7 + $0x10] sm:$0xff]
          %v579 = vld [vmem:[#allocation7 + $0x18] sm:$0xff]
          %580 = vmatprep.subr.mxu0 0.0
          %581 = vmatpush1.msra.mxu0 %v576
          %582 = vmatprep.subr.mxu0 0.0
          %583 = vmatpush1.msra.mxu0 %v577
          %584 = vmatprep.subr.mxu0 0.0
          %585 = vmatpush1.msra.mxu0 %v578
          %586 = vmatprep.subr.mxu0 0.0
          %587 = vmatpush1.msra.mxu0 %v579
          %588 = vmatprep.subr.mxu0 0.0
          %589 = vmatpush1.msra.mxu0 0.0
          %590 = vmatprep.subr.mxu0 0.0
          %591 = vmatpush1.msra.mxu0 0.0
          %592 = vmatprep.subr.mxu0 0.0
          %593 = vmatpush1.msra.mxu0 0.0
          %594 = vmatprep.subr.mxu0 0.0
          %595 = vmatpush1.msra.mxu0 0.0
          %596 = vmatprep.subr.mxu0 0.0
          %597 = vmatpush1.msra.mxu0 0.0
          %598 = vmatprep.subr.mxu0 0.0
          %599 = vmatpush1.msra.mxu0 0.0
          %600 = vmatprep.subr.mxu0 0.0
          %601 = vmatpush1.msra.mxu0 0.0
          %602 = vmatprep.subr.mxu0 0.0
          %603 = vmatpush1.msra.mxu0 0.0
          %604 = vmatprep.subr.mxu0 0.0
          %605 = vmatpush1.msra.mxu0 0.0
          %606 = vmatprep.subr.mxu0 0.0
          %607 = vmatpush1.msra.mxu0 0.0
          %608 = vmatprep.subr.mxu0 0.0
          %609 = vmatpush1.msra.mxu0 0.0
          %610 = vmatprep.subr.mxu0 0.0
          %611 = vmatpush1.msra.mxu0 0.0
          %612 = vmatprep.subr.mxu0 0.0
          %613 = vmatpush1.msra.mxu0 0.0
          %614 = vmatprep.subr.mxu0 0.0
          %615 = vmatpush1.msra.mxu0 0.0
          %616 = vmatprep.subr.mxu0 0.0
          %617 = vmatpush1.msra.mxu0 0.0
          %618 = vmatprep.subr.mxu0 0.0
          %619 = vmatpush1.msra.mxu0 0.0
          %620 = vmatprep.subr.mxu0 0.0
          %621 = vmatpush1.msra.mxu0 0.0
          %622 = vmatprep.subr.mxu0 0.0
          %623 = vmatpush1.msra.mxu0 0.0
          %624 = vmatprep.subr.mxu0 0.0
          %625 = vmatpush1.msra.mxu0 0.0
          %626 = vmatprep.subr.mxu0 0.0
          %627 = vmatpush1.msra.mxu0 0.0
          %628 = vmatprep.subr.mxu0 0.0
          %629 = vmatpush1.msra.mxu0 0.0
          %630 = vmatprep.subr.mxu0 0.0
          %631 = vmatpush1.msra.mxu0 0.0
          %632 = vmatprep.subr.mxu0 0.0
          %633 = vmatpush1.msra.mxu0 0.0
          %634 = vmatprep.subr.mxu0 0.0
          %635 = vmatpush1.msra.mxu0 0.0
          %636 = vmatprep.subr.mxu0 0.0
          %637 = vmatpush1.msra.mxu0 0.0
          %638 = vmatprep.subr.mxu0 0.0
          %639 = vmatpush1.msra.mxu0 0.0
          %640 = vmatprep.subr.mxu0 0.0
          %641 = vmatpush1.msra.mxu0 0.0
          %642 = vmatprep.subr.mxu0 0.0
          %643 = vmatpush1.msra.mxu0 0.0
          %644 = vmatprep.mubr.f32.mxu0 0.0
          %645 = vmatmul.mubr.f32.gmra.mrb[0].mxu0 %v494
          %v646 = vpop.f32.mrb[0].mxu0
          %v647 = vadd.f32 0.0, %v646
          %v648 = vpop.f32.mrb[0].mxu0
          %649 = vmatprep.mubr.f32.mxu0 0.0
          %650 = vmatmul.mubr.f32.gmra.mrb[0].mxu0 %v497
          %v651 = vpop.f32.mrb[0].mxu0
          %v652 = vadd.f32 0.0, %v651
          %v653 = vpop.f32.mrb[0].mxu0
          %654 = vdwg.mxu0
          %655 = vst [vmem:[#allocation3] sm:$0xff] %v647
          %656 = vst [vmem:[#allocation3 + $0x8] sm:$0xff] %v652
        $region102: #{tpu_custom_call.1} parent=89 // pred_fallthru
          _
        %v657 = vld [vmem:[%s431] sm:$0xff]
        %vm658 = vcmask 261120
        %v659 = vsel %vm658, %v657, 0.0
        %660 = vadd.xlane.f32.xlu0 %v659
        %v661 = vpop.xlane.xlu0 %660
        %v662 = vrcp.pop 32.0
        %v663 = vmul.f32 %v661, %v662
        %v664 = vsub.f32 %v657, %v663
        %v665 = vmul.f32 %v664, %v664
        %v666 = vsel %vm658, %v665, 0.0
        %667 = vadd.xlane.f32.xlu0 %v666
        %v668 = vpop.xlane.xlu0 %667
        %v669 = vmul.f32 %v668, %v662
        %v670 = vadd.f32 %v669, 1e-05
        %v671 = vrsqrt.pop %v670
        %v672 = vmul.f32 %v664, %v671
        %v674 = vlaneseq
        %v675 = vshrl.u32 %v674, 7
        %v676 = vsub.s32 0, %v675
        %v677 = vrot.slane %v437, %v676
        %v679 = vmul.f32 %v672, %v677
        %v681 = vlaneseq
        %v682 = vshrl.u32 %v681, 7
        %v683 = vsub.s32 0, %v682
        %v684 = vrot.slane %v438, %v683
        %v686 = vadd.f32 %v679, %v684
        %v687 = vld [vmem:[%s4] sm:$0xff]
        %v688 = vld [vmem:[%s4 + $0x8] sm:$0xff]
        %v689 = vld [vmem:[%s4 + $0x10] sm:$0xff]
        %v690 = vld [vmem:[%s4 + $0x18] sm:$0xff]
        %v692 = vsel %vm658, %v686, 0
        %694 = vmatprep.subr.mxu0 0.0
        %695 = vmatpush1.msra.mxu0 %v687
        %696 = vmatprep.subr.mxu0 0.0
        %697 = vmatpush1.msra.mxu0 %v688
        %698 = vmatprep.subr.mxu0 0.0
        %699 = vmatpush1.msra.mxu0 %v689
        %700 = vmatprep.subr.mxu0 0.0
        %701 = vmatpush1.msra.mxu0 %v690
        %702 = vmatprep.subr.mxu0 0.0
        %703 = vmatpush1.msra.mxu0 0.0
        %704 = vmatprep.subr.mxu0 0.0
        %705 = vmatpush1.msra.mxu0 0.0
        %706 = vmatprep.subr.mxu0 0.0
        %707 = vmatpush1.msra.mxu0 0.0
        %708 = vmatprep.subr.mxu0 0.0
        %709 = vmatpush1.msra.mxu0 0.0
        %710 = vmatprep.subr.mxu0 0.0
        %711 = vmatpush1.msra.mxu0 0.0
        %712 = vmatprep.subr.mxu0 0.0
        %713 = vmatpush1.msra.mxu0 0.0
        %714 = vmatprep.subr.mxu0 0.0
        %715 = vmatpush1.msra.mxu0 0.0
        %716 = vmatprep.subr.mxu0 0.0
        %717 = vmatpush1.msra.mxu0 0.0
        %718 = vmatprep.subr.mxu0 0.0
        %719 = vmatpush1.msra.mxu0 0.0
        %720 = vmatprep.subr.mxu0 0.0
        %721 = vmatpush1.msra.mxu0 0.0
        %722 = vmatprep.subr.mxu0 0.0
        %723 = vmatpush1.msra.mxu0 0.0
        %724 = vmatprep.subr.mxu0 0.0
        %725 = vmatpush1.msra.mxu0 0.0
        %726 = vmatprep.subr.mxu0 0.0
        %727 = vmatpush1.msra.mxu0 0.0
        %728 = vmatprep.subr.mxu0 0.0
        %729 = vmatpush1.msra.mxu0 0.0
        %730 = vmatprep.subr.mxu0 0.0
        %731 = vmatpush1.msra.mxu0 0.0
        %732 = vmatprep.subr.mxu0 0.0
        %733 = vmatpush1.msra.mxu0 0.0
        %734 = vmatprep.subr.mxu0 0.0
        %735 = vmatpush1.msra.mxu0 0.0
        %736 = vmatprep.subr.mxu0 0.0
        %737 = vmatpush1.msra.mxu0 0.0
        %738 = vmatprep.subr.mxu0 0.0
        %739 = vmatpush1.msra.mxu0 0.0
        %740 = vmatprep.subr.mxu0 0.0
        %741 = vmatpush1.msra.mxu0 0.0
        %742 = vmatprep.subr.mxu0 0.0
        %743 = vmatpush1.msra.mxu0 0.0
        %744 = vmatprep.subr.mxu0 0.0
        %745 = vmatpush1.msra.mxu0 0.0
        %746 = vmatprep.subr.mxu0 0.0
        %747 = vmatpush1.msra.mxu0 0.0
        %748 = vmatprep.subr.mxu0 0.0
        %749 = vmatpush1.msra.mxu0 0.0
        %750 = vmatprep.subr.mxu0 0.0
        %751 = vmatpush1.msra.mxu0 0.0
        %752 = vmatprep.subr.mxu0 0.0
        %753 = vmatpush1.msra.mxu0 0.0
        %754 = vmatprep.subr.mxu0 0.0
        %755 = vmatpush1.msra.mxu0 0.0
        %756 = vmatprep.subr.mxu0 0.0
        %757 = vmatpush1.msra.mxu0 0.0
        %758 = vmatprep.mubr.f32.mxu0 0.0
        %759 = vmatmul.mubr.f32.gmra.mrb[0].mxu0 %v692
        %v760 = vpop.f32.mrb[0].mxu0
        %v761 = vadd.f32 0.0, %v760
        %v762 = vpop.f32.mrb[0].mxu0
        %763 = vdwg.mxu0
        %v764 = vmul.f32 %v761, 0.17677669
        %765 = vst [vmem:[#allocation4] sm:$0xff] %v764
        %v766 = vld [vmem:[#allocation4] sm:$0xff]
        %v767 = vld [vmem:[#allocation2] sm:$0xff]
        %v768 = vld [vmem:[#allocation2 + $0x8] sm:$0xff]
        %v769 = vld [vmem:[#allocation3] sm:$0xff]
        %v770 = vld [vmem:[#allocation3 + $0x8] sm:$0xff]
        %v772 = vsel %vm658, %v766, 0
        %v775 = vsel %vm658, %v767, 0
        %v778 = vsel %vm658, %v768, 0
        %780 = vmatprep.subr.mxu0 0.0
        %781 = vmatpush1.xpose.msra.mxu0 %v775
        %782 = vmatprep.subr.mxu0 0.0
        %783 = vmatpush1.xpose.msra.mxu0 %v778
        %784 = vmatprep.subr.mxu0 0.0
        %785 = vmatpush1.xpose.msra.mxu0 0.0
        %786 = vmatprep.subr.mxu0 0.0
        %787 = vmatpush1.xpose.msra.mxu0 0.0
        %788 = vmatprep.subr.mxu0 0.0
        %789 = vmatpush1.xpose.msra.mxu0 0.0
        %790 = vmatprep.subr.mxu0 0.0
        %791 = vmatpush1.xpose.msra.mxu0 0.0
        %792 = vmatprep.subr.mxu0 0.0
        %793 = vmatpush1.xpose.msra.mxu0 0.0
        %794 = vmatprep.subr.mxu0 0.0
        %795 = vmatpush1.xpose.msra.mxu0 0.0
        %796 = vmatprep.subr.mxu0 0.0
        %797 = vmatpush1.xpose.msra.mxu0 0.0
        %798 = vmatprep.subr.mxu0 0.0
        %799 = vmatpush1.xpose.msra.mxu0 0.0
        %800 = vmatprep.subr.mxu0 0.0
        %801 = vmatpush1.xpose.msra.mxu0 0.0
        %802 = vmatprep.subr.mxu0 0.0
        %803 = vmatpush1.xpose.msra.mxu0 0.0
        %804 = vmatprep.subr.mxu0 0.0
        %805 = vmatpush1.xpose.msra.mxu0 0.0
        %806 = vmatprep.subr.mxu0 0.0
        %807 = vmatpush1.xpose.msra.mxu0 0.0
        %808 = vmatprep.subr.mxu0 0.0
        %809 = vmatpush1.xpose.msra.mxu0 0.0
        %810 = vmatprep.subr.mxu0 0.0
        %811 = vmatpush1.xpose.msra.mxu0 0.0
        %812 = vmatprep.subr.mxu0 0.0
        %813 = vmatpush1.xpose.msra.mxu0 0.0
        %814 = vmatprep.subr.mxu0 0.0
        %815 = vmatpush1.xpose.msra.mxu0 0.0
        %816 = vmatprep.subr.mxu0 0.0
        %817 = vmatpush1.xpose.msra.mxu0 0.0
        %818 = vmatprep.subr.mxu0 0.0
        %819 = vmatpush1.xpose.msra.mxu0 0.0
        %820 = vmatprep.subr.mxu0 0.0
        %821 = vmatpush1.xpose.msra.mxu0 0.0
        %822 = vmatprep.subr.mxu0 0.0
        %823 = vmatpush1.xpose.msra.mxu0 0.0
        %824 = vmatprep.subr.mxu0 0.0
        %825 = vmatpush1.xpose.msra.mxu0 0.0
        %826 = vmatprep.subr.mxu0 0.0
        %827 = vmatpush1.xpose.msra.mxu0 0.0
        %828 = vmatprep.subr.mxu0 0.0
        %829 = vmatpush1.xpose.msra.mxu0 0.0
        %830 = vmatprep.subr.mxu0 0.0
        %831 = vmatpush1.xpose.msra.mxu0 0.0
        %832 = vmatprep.subr.mxu0 0.0
        %833 = vmatpush1.xpose.msra.mxu0 0.0
        %834 = vmatprep.subr.mxu0 0.0
        %835 = vmatpush1.xpose.msra.mxu0 0.0
        %836 = vmatprep.subr.mxu0 0.0
        %837 = vmatpush1.xpose.msra.mxu0 0.0
        %838 = vmatprep.subr.mxu0 0.0
        %839 = vmatpush1.xpose.msra.mxu0 0.0
        %840 = vmatprep.subr.mxu0 0.0
        %841 = vmatpush1.xpose.msra.mxu0 0.0
        %842 = vmatprep.subr.mxu0 0.0
        %843 = vmatpush1.xpose.msra.mxu0 0.0
        %844 = vmatprep.mubr.f32.mxu0 0.0
        %845 = vmatmul.mubr.f32.gmra.mrb[0].mxu0 %v772
        %v846 = vpop.f32.mrb[0].mxu0
        %v847 = vadd.f32 0.0, %v846
        %v848 = vpop.f32.mrb[0].mxu0
        %849 = vdwg.mxu0
        %vm850 = vcmask 130048
        %v851 = vsel %vm850, %v847, -inf
        %852 = vmax.xlane.f32.xlu0 %v851
        %v853 = vpop.xlane.xlu0 %852
        %v854 = vsub.f32 %v847, %v853
        %v855 = vmul.f32 %v854, 1.442695
        %v856 = vpow.pop %v855
        %v857 = vsel %vm850, %v856, 0.0
        %858 = vadd.xlane.f32.xlu0 %v857
        %v859 = vpop.xlane.xlu0 %858
        %v861 = vsel %vm850, %v856, 0
        %863 = vmatprep.subr.mxu0 0.0
        %864 = vmatpush1.msra.mxu0 %v769
        %865 = vmatprep.subr.mxu0 0.0
        %866 = vmatpush1.msra.mxu0 %v770
        %867 = vmatprep.subr.mxu0 0.0
        %868 = vmatpush1.msra.mxu0 0.0
        %869 = vmatprep.subr.mxu0 0.0
        %870 = vmatpush1.msra.mxu0 0.0
        %871 = vmatprep.subr.mxu0 0.0
        %872 = vmatpush1.msra.mxu0 0.0
        %873 = vmatprep.subr.mxu0 0.0
        %874 = vmatpush1.msra.mxu0 0.0
        %875 = vmatprep.subr.mxu0 0.0
        %876 = vmatpush1.msra.mxu0 0.0
        %877 = vmatprep.subr.mxu0 0.0
        %878 = vmatpush1.msra.mxu0 0.0
        %879 = vmatprep.subr.mxu0 0.0
        %880 = vmatpush1.msra.mxu0 0.0
        %881 = vmatprep.subr.mxu0 0.0
        %882 = vmatpush1.msra.mxu0 0.0
        %883 = vmatprep.subr.mxu0 0.0
        %884 = vmatpush1.msra.mxu0 0.0
        %885 = vmatprep.subr.mxu0 0.0
        %886 = vmatpush1.msra.mxu0 0.0
        %887 = vmatprep.subr.mxu0 0.0
        %888 = vmatpush1.msra.mxu0 0.0
        %889 = vmatprep.subr.mxu0 0.0
        %890 = vmatpush1.msra.mxu0 0.0
        %891 = vmatprep.subr.mxu0 0.0
        %892 = vmatpush1.msra.mxu0 0.0
        %893 = vmatprep.subr.mxu0 0.0
        %894 = vmatpush1.msra.mxu0 0.0
        %895 = vmatprep.subr.mxu0 0.0
        %896 = vmatpush1.msra.mxu0 0.0
        %897 = vmatprep.subr.mxu0 0.0
        %898 = vmatpush1.msra.mxu0 0.0
        %899 = vmatprep.subr.mxu0 0.0
        %900 = vmatpush1.msra.mxu0 0.0
        %901 = vmatprep.subr.mxu0 0.0
        %902 = vmatpush1.msra.mxu0 0.0
        %903 = vmatprep.subr.mxu0 0.0
        %904 = vmatpush1.msra.mxu0 0.0
        %905 = vmatprep.subr.mxu0 0.0
        %906 = vmatpush1.msra.mxu0 0.0
        %907 = vmatprep.subr.mxu0 0.0
        %908 = vmatpush1.msra.mxu0 0.0
        %909 = vmatprep.subr.mxu0 0.0
        %910 = vmatpush1.msra.mxu0 0.0
        %911 = vmatprep.subr.mxu0 0.0
        %912 = vmatpush1.msra.mxu0 0.0
        %913 = vmatprep.subr.mxu0 0.0
        %914 = vmatpush1.msra.mxu0 0.0
        %915 = vmatprep.subr.mxu0 0.0
        %916 = vmatpush1.msra.mxu0 0.0
        %917 = vmatprep.subr.mxu0 0.0
        %918 = vmatpush1.msra.mxu0 0.0
        %919 = vmatprep.subr.mxu0 0.0
        %920 = vmatpush1.msra.mxu0 0.0
        %921 = vmatprep.subr.mxu0 0.0
        %922 = vmatpush1.msra.mxu0 0.0
        %923 = vmatprep.subr.mxu0 0.0
        %924 = vmatpush1.msra.mxu0 0.0
        %925 = vmatprep.subr.mxu0 0.0
        %926 = vmatpush1.msra.mxu0 0.0
        %927 = vmatprep.mubr.f32.mxu0 0.0
        %928 = vmatmul.mubr.f32.gmra.mrb[0].mxu0 %v861
        %v929 = vpop.f32.mrb[0].mxu0
        %v930 = vadd.f32 0.0, %v929
        %v931 = vpop.f32.mrb[0].mxu0
        %932 = vdwg.mxu0
        %v933 = vrcp.pop %v859
        %v934 = vmul.f32 1.0, %v933
        %v935 = vmul.f32 %v930, %v934
        %936 = vst.msk [vmem:[#allocation5] sm:$0xff] %vm658, %v935
        %v937 = vld [vmem:[#allocation4] sm:$0xff]
        %v938 = vld [vmem:[#allocation2] sm:$0xff]
        %v939 = vld [vmem:[#allocation2 + $0x8] sm:$0xff]
        %v940 = vld [vmem:[#allocation3] sm:$0xff]
        %v941 = vld [vmem:[#allocation3 + $0x8] sm:$0xff]
        %943 = vrot.lane.b32.xlu0 %v937, 96
        %v944 = vpop.permute.xlu0 %943
        %947 = vrot.lane.b32.xlu0 %v938, 96
        %v948 = vpop.permute.xlu0 %947
        %949 = vrot.lane.b32.xlu0 %v939, 96
        %v950 = vpop.permute.xlu0 %949
        %v951 = vsel %vm658, %v944, 0
        %v953 = vsel %vm658, %v948, 0
        %v955 = vsel %vm658, %v950, 0
        %957 = vmatprep.subr.mxu0 0.0
        %958 = vmatpush1.xpose.msra.mxu0 %v953
        %959 = vmatprep.subr.mxu0 0.0
        %960 = vmatpush1.xpose.msra.mxu0 %v955
        %961 = vmatprep.subr.mxu0 0.0
        %962 = vmatpush1.xpose.msra.mxu0 0.0
        %963 = vmatprep.subr.mxu0 0.0
        %964 = vmatpush1.xpose.msra.mxu0 0.0
        %965 = vmatprep.subr.mxu0 0.0
        %966 = vmatpush1.xpose.msra.mxu0 0.0
        %967 = vmatprep.subr.mxu0 0.0
        %968 = vmatpush1.xpose.msra.mxu0 0.0
        %969 = vmatprep.subr.mxu0 0.0
        %970 = vmatpush1.xpose.msra.mxu0 0.0
        %971 = vmatprep.subr.mxu0 0.0
        %972 = vmatpush1.xpose.msra.mxu0 0.0
        %973 = vmatprep.subr.mxu0 0.0
        %974 = vmatpush1.xpose.msra.mxu0 0.0
        %975 = vmatprep.subr.mxu0 0.0
        %976 = vmatpush1.xpose.msra.mxu0 0.0
        %977 = vmatprep.subr.mxu0 0.0
        %978 = vmatpush1.xpose.msra.mxu0 0.0
        %979 = vmatprep.subr.mxu0 0.0
        %980 = vmatpush1.xpose.msra.mxu0 0.0
        %981 = vmatprep.subr.mxu0 0.0
        %982 = vmatpush1.xpose.msra.mxu0 0.0
        %983 = vmatprep.subr.mxu0 0.0
        %984 = vmatpush1.xpose.msra.mxu0 0.0
        %985 = vmatprep.subr.mxu0 0.0
        %986 = vmatpush1.xpose.msra.mxu0 0.0
        %987 = vmatprep.subr.mxu0 0.0
        %988 = vmatpush1.xpose.msra.mxu0 0.0
        %989 = vmatprep.subr.mxu0 0.0
        %990 = vmatpush1.xpose.msra.mxu0 0.0
        %991 = vmatprep.subr.mxu0 0.0
        %992 = vmatpush1.xpose.msra.mxu0 0.0
        %993 = vmatprep.subr.mxu0 0.0
        %994 = vmatpush1.xpose.msra.mxu0 0.0
        %995 = vmatprep.subr.mxu0 0.0
        %996 = vmatpush1.xpose.msra.mxu0 0.0
        %997 = vmatprep.subr.mxu0 0.0
        %998 = vmatpush1.xpose.msra.mxu0 0.0
        %999 = vmatprep.subr.mxu0 0.0
        %1000 = vmatpush1.xpose.msra.mxu0 0.0
        %1001 = vmatprep.subr.mxu0 0.0
        %1002 = vmatpush1.xpose.msra.mxu0 0.0
        %1003 = vmatprep.subr.mxu0 0.0
        %1004 = vmatpush1.xpose.msra.mxu0 0.0
        %1005 = vmatprep.subr.mxu0 0.0
        %1006 = vmatpush1.xpose.msra.mxu0 0.0
        %1007 = vmatprep.subr.mxu0 0.0
        %1008 = vmatpush1.xpose.msra.mxu0 0.0
        %1009 = vmatprep.subr.mxu0 0.0
        %1010 = vmatpush1.xpose.msra.mxu0 0.0
        %1011 = vmatprep.subr.mxu0 0.0
        %1012 = vmatpush1.xpose.msra.mxu0 0.0
        %1013 = vmatprep.subr.mxu0 0.0
        %1014 = vmatpush1.xpose.msra.mxu0 0.0
        %1015 = vmatprep.subr.mxu0 0.0
        %1016 = vmatpush1.xpose.msra.mxu0 0.0
        %1017 = vmatprep.subr.mxu0 0.0
        %1018 = vmatpush1.xpose.msra.mxu0 0.0
        %1019 = vmatprep.subr.mxu0 0.0
        %1020 = vmatpush1.xpose.msra.mxu0 0.0
        %1021 = vmatprep.mubr.f32.mxu0 0.0
        %1022 = vmatmul.mubr.f32.gmra.mrb[0].mxu0 %v951
        %v1023 = vpop.f32.mrb[0].mxu0
        %v1024 = vadd.f32 0.0, %v1023
        %v1025 = vpop.f32.mrb[0].mxu0
        %1026 = vdwg.mxu0
        %v1027 = vsel %vm850, %v1024, -inf
        %1028 = vmax.xlane.f32.xlu0 %v1027
        %v1029 = vpop.xlane.xlu0 %1028
        %v1030 = vsub.f32 %v1024, %v1029
        %v1031 = vmul.f32 %v1030, 1.442695
        %v1032 = vpow.pop %v1031
        %v1033 = vsel %vm850, %v1032, 0.0
        %1034 = vadd.xlane.f32.xlu0 %v1033
        %v1035 = vpop.xlane.xlu0 %1034
        %1038 = vrot.lane.b32.xlu0 %v940, 96
        %v1039 = vpop.permute.xlu0 %1038
        %1040 = vrot.lane.b32.xlu0 %v941, 96
        %v1041 = vpop.permute.xlu0 %1040
        %v1045 = vsel %vm850, %v1032, 0
        %1047 = vmatprep.subr.mxu0 0.0
        %1048 = vmatpush1.msra.mxu0 %v1039
        %1049 = vmatprep.subr.mxu0 0.0
        %1050 = vmatpush1.msra.mxu0 %v1041
        %1051 = vmatprep.subr.mxu0 0.0
        %1052 = vmatpush1.msra.mxu0 0.0
        %1053 = vmatprep.subr.mxu0 0.0
        %1054 = vmatpush1.msra.mxu0 0.0
        %1055 = vmatprep.subr.mxu0 0.0
        %1056 = vmatpush1.msra.mxu0 0.0
        %1057 = vmatprep.subr.mxu0 0.0
        %1058 = vmatpush1.msra.mxu0 0.0
        %1059 = vmatprep.subr.mxu0 0.0
        %1060 = vmatpush1.msra.mxu0 0.0
        %1061 = vmatprep.subr.mxu0 0.0
        %1062 = vmatpush1.msra.mxu0 0.0
        %1063 = vmatprep.subr.mxu0 0.0
        %1064 = vmatpush1.msra.mxu0 0.0
        %1065 = vmatprep.subr.mxu0 0.0
        %1066 = vmatpush1.msra.mxu0 0.0
        %1067 = vmatprep.subr.mxu0 0.0
        %1068 = vmatpush1.msra.mxu0 0.0
        %1069 = vmatprep.subr.mxu0 0.0
        %1070 = vmatpush1.msra.mxu0 0.0
        %1071 = vmatprep.subr.mxu0 0.0
        %1072 = vmatpush1.msra.mxu0 0.0
        %1073 = vmatprep.subr.mxu0 0.0
        %1074 = vmatpush1.msra.mxu0 0.0
        %1075 = vmatprep.subr.mxu0 0.0
        %1076 = vmatpush1.msra.mxu0 0.0
        %1077 = vmatprep.subr.mxu0 0.0
        %1078 = vmatpush1.msra.mxu0 0.0
        %1079 = vmatprep.subr.mxu0 0.0
        %1080 = vmatpush1.msra.mxu0 0.0
        %1081 = vmatprep.subr.mxu0 0.0
        %1082 = vmatpush1.msra.mxu0 0.0
        %1083 = vmatprep.subr.mxu0 0.0
        %1084 = vmatpush1.msra.mxu0 0.0
        %1085 = vmatprep.subr.mxu0 0.0
        %1086 = vmatpush1.msra.mxu0 0.0
        %1087 = vmatprep.subr.mxu0 0.0
        %1088 = vmatpush1.msra.mxu0 0.0
        %1089 = vmatprep.subr.mxu0 0.0
        %1090 = vmatpush1.msra.mxu0 0.0
        %1091 = vmatprep.subr.mxu0 0.0
        %1092 = vmatpush1.msra.mxu0 0.0
        %1093 = vmatprep.subr.mxu0 0.0
        %1094 = vmatpush1.msra.mxu0 0.0
        %1095 = vmatprep.subr.mxu0 0.0
        %1096 = vmatpush1.msra.mxu0 0.0
        %1097 = vmatprep.subr.mxu0 0.0
        %1098 = vmatpush1.msra.mxu0 0.0
        %1099 = vmatprep.subr.mxu0 0.0
        %1100 = vmatpush1.msra.mxu0 0.0
        %1101 = vmatprep.subr.mxu0 0.0
        %1102 = vmatpush1.msra.mxu0 0.0
        %1103 = vmatprep.subr.mxu0 0.0
        %1104 = vmatpush1.msra.mxu0 0.0
        %1105 = vmatprep.subr.mxu0 0.0
        %1106 = vmatpush1.msra.mxu0 0.0
        %1107 = vmatprep.subr.mxu0 0.0
        %1108 = vmatpush1.msra.mxu0 0.0
        %1109 = vmatprep.subr.mxu0 0.0
        %1110 = vmatpush1.msra.mxu0 0.0
        %1111 = vmatprep.mubr.f32.mxu0 0.0
        %1112 = vmatmul.mubr.f32.gmra.mrb[0].mxu0 %v1045
        %v1113 = vpop.f32.mrb[0].mxu0
        %v1114 = vadd.f32 0.0, %v1113
        %v1115 = vpop.f32.mrb[0].mxu0
        %1116 = vdwg.mxu0
        %v1117 = vrcp.pop %v1035
        %v1118 = vmul.f32 1.0, %v1117
        %v1119 = vmul.f32 %v1114, %v1118
        %1121 = vrot.lane.b32.xlu0 %v1119, 32
        %v1122 = vpop.permute.xlu0 %1121
        %vm1124 = vcmask 523520
        %1125 = vst.msk [vmem:[#allocation5] sm:$0xff] %vm1124, %v1122
        %v1126 = vld [vmem:[#allocation4] sm:$0xff]
        %v1127 = vld [vmem:[#allocation2] sm:$0xff]
        %v1128 = vld [vmem:[#allocation2 + $0x8] sm:$0xff]
        %v1129 = vld [vmem:[#allocation3] sm:$0xff]
        %v1130 = vld [vmem:[#allocation3 + $0x8] sm:$0xff]
        %1132 = vrot.lane.b32.xlu0 %v1126, 64
        %v1133 = vpop.permute.xlu0 %1132
        %1136 = vrot.lane.b32.xlu0 %v1127, 64
        %v1137 = vpop.permute.xlu0 %1136
        %1138 = vrot.lane.b32.xlu0 %v1128, 64
        %v1139 = vpop.permute.xlu0 %1138
        %v1140 = vsel %vm658, %v1133, 0
        %v1142 = vsel %vm658, %v1137, 0
        %v1144 = vsel %vm658, %v1139, 0
        %1146 = vmatprep.subr.mxu0 0.0
        %1147 = vmatpush1.xpose.msra.mxu0 %v1142
        %1148 = vmatprep.subr.mxu0 0.0
        %1149 = vmatpush1.xpose.msra.mxu0 %v1144
        %1150 = vmatprep.subr.mxu0 0.0
        %1151 = vmatpush1.xpose.msra.mxu0 0.0
        %1152 = vmatprep.subr.mxu0 0.0
        %1153 = vmatpush1.xpose.msra.mxu0 0.0
        %1154 = vmatprep.subr.mxu0 0.0
        %1155 = vmatpush1.xpose.msra.mxu0 0.0
        %1156 = vmatprep.subr.mxu0 0.0
        %1157 = vmatpush1.xpose.msra.mxu0 0.0
        %1158 = vmatprep.subr.mxu0 0.0
        %1159 = vmatpush1.xpose.msra.mxu0 0.0
        %1160 = vmatprep.subr.mxu0 0.0
        %1161 = vmatpush1.xpose.msra.mxu0 0.0
        %1162 = vmatprep.subr.mxu0 0.0
        %1163 = vmatpush1.xpose.msra.mxu0 0.0
        %1164 = vmatprep.subr.mxu0 0.0
        %1165 = vmatpush1.xpose.msra.mxu0 0.0
        %1166 = vmatprep.subr.mxu0 0.0
        %1167 = vmatpush1.xpose.msra.mxu0 0.0
        %1168 = vmatprep.subr.mxu0 0.0
        %1169 = vmatpush1.xpose.msra.mxu0 0.0
        %1170 = vmatprep.subr.mxu0 0.0
        %1171 = vmatpush1.xpose.msra.mxu0 0.0
        %1172 = vmatprep.subr.mxu0 0.0
        %1173 = vmatpush1.xpose.msra.mxu0 0.0
        %1174 = vmatprep.subr.mxu0 0.0
        %1175 = vmatpush1.xpose.msra.mxu0 0.0
        %1176 = vmatprep.subr.mxu0 0.0
        %1177 = vmatpush1.xpose.msra.mxu0 0.0
        %1178 = vmatprep.subr.mxu0 0.0
        %1179 = vmatpush1.xpose.msra.mxu0 0.0
        %1180 = vmatprep.subr.mxu0 0.0
        %1181 = vmatpush1.xpose.msra.mxu0 0.0
        %1182 = vmatprep.subr.mxu0 0.0
        %1183 = vmatpush1.xpose.msra.mxu0 0.0
        %1184 = vmatprep.subr.mxu0 0.0
        %1185 = vmatpush1.xpose.msra.mxu0 0.0
        %1186 = vmatprep.subr.mxu0 0.0
        %1187 = vmatpush1.xpose.msra.mxu0 0.0
        %1188 = vmatprep.subr.mxu0 0.0
        %1189 = vmatpush1.xpose.msra.mxu0 0.0
        %1190 = vmatprep.subr.mxu0 0.0
        %1191 = vmatpush1.xpose.msra.mxu0 0.0
        %1192 = vmatprep.subr.mxu0 0.0
        %1193 = vmatpush1.xpose.msra.mxu0 0.0
        %1194 = vmatprep.subr.mxu0 0.0
        %1195 = vmatpush1.xpose.msra.mxu0 0.0
        %1196 = vmatprep.subr.mxu0 0.0
        %1197 = vmatpush1.xpose.msra.mxu0 0.0
        %1198 = vmatprep.subr.mxu0 0.0
        %1199 = vmatpush1.xpose.msra.mxu0 0.0
        %1200 = vmatprep.subr.mxu0 0.0
        %1201 = vmatpush1.xpose.msra.mxu0 0.0
        %1202 = vmatprep.subr.mxu0 0.0
        %1203 = vmatpush1.xpose.msra.mxu0 0.0
        %1204 = vmatprep.subr.mxu0 0.0
        %1205 = vmatpush1.xpose.msra.mxu0 0.0
        %1206 = vmatprep.subr.mxu0 0.0
        %1207 = vmatpush1.xpose.msra.mxu0 0.0
        %1208 = vmatprep.subr.mxu0 0.0
        %1209 = vmatpush1.xpose.msra.mxu0 0.0
        %1210 = vmatprep.mubr.f32.mxu0 0.0
        %1211 = vmatmul.mubr.f32.gmra.mrb[0].mxu0 %v1140
        %v1212 = vpop.f32.mrb[0].mxu0
        %v1213 = vadd.f32 0.0, %v1212
        %v1214 = vpop.f32.mrb[0].mxu0
        %1215 = vdwg.mxu0
        %v1216 = vsel %vm850, %v1213, -inf
        %1217 = vmax.xlane.f32.xlu0 %v1216
        %v1218 = vpop.xlane.xlu0 %1217
        %v1219 = vsub.f32 %v1213, %v1218
        %v1220 = vmul.f32 %v1219, 1.442695
        %v1221 = vpow.pop %v1220
        %v1222 = vsel %vm850, %v1221, 0.0
        %1223 = vadd.xlane.f32.xlu0 %v1222
        %v1224 = vpop.xlane.xlu0 %1223
        %1227 = vrot.lane.b32.xlu0 %v1129, 64
        %v1228 = vpop.permute.xlu0 %1227
        %1229 = vrot.lane.b32.xlu0 %v1130, 64
        %v1230 = vpop.permute.xlu0 %1229
        %v1234 = vsel %vm850, %v1221, 0
        %1236 = vmatprep.subr.mxu0 0.0
        %1237 = vmatpush1.msra.mxu0 %v1228
        %1238 = vmatprep.subr.mxu0 0.0
        %1239 = vmatpush1.msra.mxu0 %v1230
        %1240 = vmatprep.subr.mxu0 0.0
        %1241 = vmatpush1.msra.mxu0 0.0
        %1242 = vmatprep.subr.mxu0 0.0
        %1243 = vmatpush1.msra.mxu0 0.0
        %1244 = vmatprep.subr.mxu0 0.0
        %1245 = vmatpush1.msra.mxu0 0.0
        %1246 = vmatprep.subr.mxu0 0.0
        %1247 = vmatpush1.msra.mxu0 0.0
        %1248 = vmatprep.subr.mxu0 0.0
        %1249 = vmatpush1.msra.mxu0 0.0
        %1250 = vmatprep.subr.mxu0 0.0
        %1251 = vmatpush1.msra.mxu0 0.0
        %1252 = vmatprep.subr.mxu0 0.0
        %1253 = vmatpush1.msra.mxu0 0.0
        %1254 = vmatprep.subr.mxu0 0.0
        %1255 = vmatpush1.msra.mxu0 0.0
        %1256 = vmatprep.subr.mxu0 0.0
        %1257 = vmatpush1.msra.mxu0 0.0
        %1258 = vmatprep.subr.mxu0 0.0
        %1259 = vmatpush1.msra.mxu0 0.0
        %1260 = vmatprep.subr.mxu0 0.0
        %1261 = vmatpush1.msra.mxu0 0.0
        %1262 = vmatprep.subr.mxu0 0.0
        %1263 = vmatpush1.msra.mxu0 0.0
        %1264 = vmatprep.subr.mxu0 0.0
        %1265 = vmatpush1.msra.mxu0 0.0
        %1266 = vmatprep.subr.mxu0 0.0
        %1267 = vmatpush1.msra.mxu0 0.0
        %1268 = vmatprep.subr.mxu0 0.0
        %1269 = vmatpush1.msra.mxu0 0.0
        %1270 = vmatprep.subr.mxu0 0.0
        %1271 = vmatpush1.msra.mxu0 0.0
        %1272 = vmatprep.subr.mxu0 0.0
        %1273 = vmatpush1.msra.mxu0 0.0
        %1274 = vmatprep.subr.mxu0 0.0
        %1275 = vmatpush1.msra.mxu0 0.0
        %1276 = vmatprep.subr.mxu0 0.0
        %1277 = vmatpush1.msra.mxu0 0.0
        %1278 = vmatprep.subr.mxu0 0.0
        %1279 = vmatpush1.msra.mxu0 0.0
        %1280 = vmatprep.subr.mxu0 0.0
        %1281 = vmatpush1.msra.mxu0 0.0
        %1282 = vmatprep.subr.mxu0 0.0
        %1283 = vmatpush1.msra.mxu0 0.0
        %1284 = vmatprep.subr.mxu0 0.0
        %1285 = vmatpush1.msra.mxu0 0.0
        %1286 = vmatprep.subr.mxu0 0.0
        %1287 = vmatpush1.msra.mxu0 0.0
        %1288 = vmatprep.subr.mxu0 0.0
        %1289 = vmatpush1.msra.mxu0 0.0
        %1290 = vmatprep.subr.mxu0 0.0
        %1291 = vmatpush1.msra.mxu0 0.0
        %1292 = vmatprep.subr.mxu0 0.0
        %1293 = vmatpush1.msra.mxu0 0.0
        %1294 = vmatprep.subr.mxu0 0.0
        %1295 = vmatpush1.msra.mxu0 0.0
        %1296 = vmatprep.subr.mxu0 0.0
        %1297 = vmatpush1.msra.mxu0 0.0
        %1298 = vmatprep.subr.mxu0 0.0
        %1299 = vmatpush1.msra.mxu0 0.0
        %1300 = vmatprep.mubr.f32.mxu0 0.0
        %1301 = vmatmul.mubr.f32.gmra.mrb[0].mxu0 %v1234
        %v1302 = vpop.f32.mrb[0].mxu0
        %v1303 = vadd.f32 0.0, %v1302
        %v1304 = vpop.f32.mrb[0].mxu0
        %1305 = vdwg.mxu0
        %v1306 = vrcp.pop %v1224
        %v1307 = vmul.f32 1.0, %v1306
        %v1308 = vmul.f32 %v1303, %v1307
        %1310 = vrot.lane.b32.xlu0 %v1308, 64
        %v1311 = vpop.permute.xlu0 %1310
        %vm1313 = vcmask 785920
        %1314 = vst.msk [vmem:[#allocation5] sm:$0xff] %vm1313, %v1311
        %v1315 = vld [vmem:[#allocation4] sm:$0xff]
        %v1316 = vld [vmem:[#allocation2] sm:$0xff]
        %v1317 = vld [vmem:[#allocation2 + $0x8] sm:$0xff]
        %v1318 = vld [vmem:[#allocation3] sm:$0xff]
        %v1319 = vld [vmem:[#allocation3 + $0x8] sm:$0xff]
        %1321 = vrot.lane.b32.xlu0 %v1315, 32
        %v1322 = vpop.permute.xlu0 %1321
        %1325 = vrot.lane.b32.xlu0 %v1316, 32
        %v1326 = vpop.permute.xlu0 %1325
        %1327 = vrot.lane.b32.xlu0 %v1317, 32
        %v1328 = vpop.permute.xlu0 %1327
        %v1329 = vsel %vm658, %v1322, 0
        %v1331 = vsel %vm658, %v1326, 0
        %v1333 = vsel %vm658, %v1328, 0
        %1335 = vmatprep.subr.mxu0 0.0
        %1336 = vmatpush1.xpose.msra.mxu0 %v1331
        %1337 = vmatprep.subr.mxu0 0.0
        %1338 = vmatpush1.xpose.msra.mxu0 %v1333
        %1339 = vmatprep.subr.mxu0 0.0
        %1340 = vmatpush1.xpose.msra.mxu0 0.0
        %1341 = vmatprep.subr.mxu0 0.0
        %1342 = vmatpush1.xpose.msra.mxu0 0.0
        %1343 = vmatprep.subr.mxu0 0.0
        %1344 = vmatpush1.xpose.msra.mxu0 0.0
        %1345 = vmatprep.subr.mxu0 0.0
        %1346 = vmatpush1.xpose.msra.mxu0 0.0
        %1347 = vmatprep.subr.mxu0 0.0
        %1348 = vmatpush1.xpose.msra.mxu0 0.0
        %1349 = vmatprep.subr.mxu0 0.0
        %1350 = vmatpush1.xpose.msra.mxu0 0.0
        %1351 = vmatprep.subr.mxu0 0.0
        %1352 = vmatpush1.xpose.msra.mxu0 0.0
        %1353 = vmatprep.subr.mxu0 0.0
        %1354 = vmatpush1.xpose.msra.mxu0 0.0
        %1355 = vmatprep.subr.mxu0 0.0
        %1356 = vmatpush1.xpose.msra.mxu0 0.0
        %1357 = vmatprep.subr.mxu0 0.0
        %1358 = vmatpush1.xpose.msra.mxu0 0.0
        %1359 = vmatprep.subr.mxu0 0.0
        %1360 = vmatpush1.xpose.msra.mxu0 0.0
        %1361 = vmatprep.subr.mxu0 0.0
        %1362 = vmatpush1.xpose.msra.mxu0 0.0
        %1363 = vmatprep.subr.mxu0 0.0
        %1364 = vmatpush1.xpose.msra.mxu0 0.0
        %1365 = vmatprep.subr.mxu0 0.0
        %1366 = vmatpush1.xpose.msra.mxu0 0.0
        %1367 = vmatprep.subr.mxu0 0.0
        %1368 = vmatpush1.xpose.msra.mxu0 0.0
        %1369 = vmatprep.subr.mxu0 0.0
        %1370 = vmatpush1.xpose.msra.mxu0 0.0
        %1371 = vmatprep.subr.mxu0 0.0
        %1372 = vmatpush1.xpose.msra.mxu0 0.0
        %1373 = vmatprep.subr.mxu0 0.0
        %1374 = vmatpush1.xpose.msra.mxu0 0.0
        %1375 = vmatprep.subr.mxu0 0.0
        %1376 = vmatpush1.xpose.msra.mxu0 0.0
        %1377 = vmatprep.subr.mxu0 0.0
        %1378 = vmatpush1.xpose.msra.mxu0 0.0
        %1379 = vmatprep.subr.mxu0 0.0
        %1380 = vmatpush1.xpose.msra.mxu0 0.0
        %1381 = vmatprep.subr.mxu0 0.0
        %1382 = vmatpush1.xpose.msra.mxu0 0.0
        %1383 = vmatprep.subr.mxu0 0.0
        %1384 = vmatpush1.xpose.msra.mxu0 0.0
        %1385 = vmatprep.subr.mxu0 0.0
        %1386 = vmatpush1.xpose.msra.mxu0 0.0
        %1387 = vmatprep.subr.mxu0 0.0
        %1388 = vmatpush1.xpose.msra.mxu0 0.0
        %1389 = vmatprep.subr.mxu0 0.0
        %1390 = vmatpush1.xpose.msra.mxu0 0.0
        %1391 = vmatprep.subr.mxu0 0.0
        %1392 = vmatpush1.xpose.msra.mxu0 0.0
        %1393 = vmatprep.subr.mxu0 0.0
        %1394 = vmatpush1.xpose.msra.mxu0 0.0
        %1395 = vmatprep.subr.mxu0 0.0
        %1396 = vmatpush1.xpose.msra.mxu0 0.0
        %1397 = vmatprep.subr.mxu0 0.0
        %1398 = vmatpush1.xpose.msra.mxu0 0.0
        %1399 = vmatprep.mubr.f32.mxu0 0.0
        %1400 = vmatmul.mubr.f32.gmra.mrb[0].mxu0 %v1329
        %v1401 = vpop.f32.mrb[0].mxu0
        %v1402 = vadd.f32 0.0, %v1401
        %v1403 = vpop.f32.mrb[0].mxu0
        %1404 = vdwg.mxu0
        %v1405 = vsel %vm850, %v1402, -inf
        %1406 = vmax.xlane.f32.xlu0 %v1405
        %v1407 = vpop.xlane.xlu0 %1406
        %v1408 = vsub.f32 %v1402, %v1407
        %v1409 = vmul.f32 %v1408, 1.442695
        %v1410 = vpow.pop %v1409
        %v1411 = vsel %vm850, %v1410, 0.0
        %1412 = vadd.xlane.f32.xlu0 %v1411
        %v1413 = vpop.xlane.xlu0 %1412
        %1416 = vrot.lane.b32.xlu0 %v1318, 32
        %v1417 = vpop.permute.xlu0 %1416
        %1418 = vrot.lane.b32.xlu0 %v1319, 32
        %v1419 = vpop.permute.xlu0 %1418
        %v1423 = vsel %vm850, %v1410, 0
        %1425 = vmatprep.subr.mxu0 0.0
        %1426 = vmatpush1.msra.mxu0 %v1417
        %1427 = vmatprep.subr.mxu0 0.0
        %1428 = vmatpush1.msra.mxu0 %v1419
        %1429 = vmatprep.subr.mxu0 0.0
        %1430 = vmatpush1.msra.mxu0 0.0
        %1431 = vmatprep.subr.mxu0 0.0
        %1432 = vmatpush1.msra.mxu0 0.0
        %1433 = vmatprep.subr.mxu0 0.0
        %1434 = vmatpush1.msra.mxu0 0.0
        %1435 = vmatprep.subr.mxu0 0.0
        %1436 = vmatpush1.msra.mxu0 0.0
        %1437 = vmatprep.subr.mxu0 0.0
        %1438 = vmatpush1.msra.mxu0 0.0
        %1439 = vmatprep.subr.mxu0 0.0
        %1440 = vmatpush1.msra.mxu0 0.0
        %1441 = vmatprep.subr.mxu0 0.0
        %1442 = vmatpush1.msra.mxu0 0.0
        %1443 = vmatprep.subr.mxu0 0.0
        %1444 = vmatpush1.msra.mxu0 0.0
        %1445 = vmatprep.subr.mxu0 0.0
        %1446 = vmatpush1.msra.mxu0 0.0
        %1447 = vmatprep.subr.mxu0 0.0
        %1448 = vmatpush1.msra.mxu0 0.0
        %1449 = vmatprep.subr.mxu0 0.0
        %1450 = vmatpush1.msra.mxu0 0.0
        %1451 = vmatprep.subr.mxu0 0.0
        %1452 = vmatpush1.msra.mxu0 0.0
        %1453 = vmatprep.subr.mxu0 0.0
        %1454 = vmatpush1.msra.mxu0 0.0
        %1455 = vmatprep.subr.mxu0 0.0
        %1456 = vmatpush1.msra.mxu0 0.0
        %1457 = vmatprep.subr.mxu0 0.0
        %1458 = vmatpush1.msra.mxu0 0.0
        %1459 = vmatprep.subr.mxu0 0.0
        %1460 = vmatpush1.msra.mxu0 0.0
        %1461 = vmatprep.subr.mxu0 0.0
        %1462 = vmatpush1.msra.mxu0 0.0
        %1463 = vmatprep.subr.mxu0 0.0
        %1464 = vmatpush1.msra.mxu0 0.0
        %1465 = vmatprep.subr.mxu0 0.0
        %1466 = vmatpush1.msra.mxu0 0.0
        %1467 = vmatprep.subr.mxu0 0.0
        %1468 = vmatpush1.msra.mxu0 0.0
        %1469 = vmatprep.subr.mxu0 0.0
        %1470 = vmatpush1.msra.mxu0 0.0
        %1471 = vmatprep.subr.mxu0 0.0
        %1472 = vmatpush1.msra.mxu0 0.0
        %1473 = vmatprep.subr.mxu0 0.0
        %1474 = vmatpush1.msra.mxu0 0.0
        %1475 = vmatprep.subr.mxu0 0.0
        %1476 = vmatpush1.msra.mxu0 0.0
        %1477 = vmatprep.subr.mxu0 0.0
        %1478 = vmatpush1.msra.mxu0 0.0
        %1479 = vmatprep.subr.mxu0 0.0
        %1480 = vmatpush1.msra.mxu0 0.0
        %1481 = vmatprep.subr.mxu0 0.0
        %1482 = vmatpush1.msra.mxu0 0.0
        %1483 = vmatprep.subr.mxu0 0.0
        %1484 = vmatpush1.msra.mxu0 0.0
        %1485 = vmatprep.subr.mxu0 0.0
        %1486 = vmatpush1.msra.mxu0 0.0
        %1487 = vmatprep.subr.mxu0 0.0
        %1488 = vmatpush1.msra.mxu0 0.0
        %1489 = vmatprep.mubr.f32.mxu0 0.0
        %1490 = vmatmul.mubr.f32.gmra.mrb[0].mxu0 %v1423
        %v1491 = vpop.f32.mrb[0].mxu0
        %v1492 = vadd.f32 0.0, %v1491
        %v1493 = vpop.f32.mrb[0].mxu0
        %1494 = vdwg.mxu0
        %v1495 = vrcp.pop %v1413
        %v1496 = vmul.f32 1.0, %v1495
        %v1497 = vmul.f32 %v1492, %v1496
        %1499 = vrot.lane.b32.xlu0 %v1497, 96
        %v1500 = vpop.permute.xlu0 %1499
        %vm1502 = vcmask 1048320
        %1503 = vst.msk [vmem:[#allocation5] sm:$0xff] %vm1502, %v1500
        %v1504 = vld [vmem:[#allocation5] sm:$0xff]
        %v1505 = vld [vmem:[%s7] sm:$0xff]
        %v1506 = vld [vmem:[%s7 + $0x8] sm:$0xff]
        %v1507 = vld [vmem:[%s7 + $0x10] sm:$0xff]
        %v1508 = vld [vmem:[%s7 + $0x18] sm:$0xff]
        %v1509 = vld [vmem:[%s7 + $0x20] sm:$0xff]
        %v1510 = vld [vmem:[%s7 + $0x28] sm:$0xff]
        %v1511 = vld [vmem:[%s7 + $0x30] sm:$0xff]
        %v1512 = vld [vmem:[%s7 + $0x38] sm:$0xff]
        %v1513 = vld [vmem:[%s7 + $0x40] sm:$0xff]
        %v1514 = vld [vmem:[%s7 + $0x48] sm:$0xff]
        %v1515 = vld [vmem:[%s7 + $0x50] sm:$0xff]
        %v1516 = vld [vmem:[%s7 + $0x58] sm:$0xff]
        %v1517 = vld [vmem:[%s7 + $0x60] sm:$0xff]
        %v1518 = vld [vmem:[%s7 + $0x68] sm:$0xff]
        %v1519 = vld [vmem:[%s7 + $0x70] sm:$0xff]
        %v1520 = vld [vmem:[%s7 + $0x78] sm:$0xff]
        %v1521 = vld [vmem:[%s8] sm:$0x1]
        %v1523 = vlaneseq
        %v1524 = vshrl.u32 %v1523, 7
        %v1525 = vsub.s32 0, %v1524
        %v1526 = vrot.slane %v1521, %v1525
        %1528 = vmatprep.subr.mxu0 0.0
        %1529 = vmatpush1.msra.mxu0 %v1505
        %1530 = vmatprep.subr.mxu0 0.0
        %1531 = vmatpush1.msra.mxu0 %v1506
        %1532 = vmatprep.subr.mxu0 0.0
        %1533 = vmatpush1.msra.mxu0 %v1507
        %1534 = vmatprep.subr.mxu0 0.0
        %1535 = vmatpush1.msra.mxu0 %v1508
        %1536 = vmatprep.subr.mxu0 0.0
        %1537 = vmatpush1.msra.mxu0 %v1509
        %1538 = vmatprep.subr.mxu0 0.0
        %1539 = vmatpush1.msra.mxu0 %v1510
        %1540 = vmatprep.subr.mxu0 0.0
        %1541 = vmatpush1.msra.mxu0 %v1511
        %1542 = vmatprep.subr.mxu0 0.0
        %1543 = vmatpush1.msra.mxu0 %v1512
        %1544 = vmatprep.subr.mxu0 0.0
        %1545 = vmatpush1.msra.mxu0 %v1513
        %1546 = vmatprep.subr.mxu0 0.0
        %1547 = vmatpush1.msra.mxu0 %v1514
        %1548 = vmatprep.subr.mxu0 0.0
        %1549 = vmatpush1.msra.mxu0 %v1515
        %1550 = vmatprep.subr.mxu0 0.0
        %1551 = vmatpush1.msra.mxu0 %v1516
        %1552 = vmatprep.subr.mxu0 0.0
        %1553 = vmatpush1.msra.mxu0 %v1517
        %1554 = vmatprep.subr.mxu0 0.0
        %1555 = vmatpush1.msra.mxu0 %v1518
        %1556 = vmatprep.subr.mxu0 0.0
        %1557 = vmatpush1.msra.mxu0 %v1519
        %1558 = vmatprep.subr.mxu0 0.0
        %1559 = vmatpush1.msra.mxu0 %v1520
        %1560 = vmatprep.subr.mxu0 0.0
        %1561 = vmatpush1.msra.mxu0 0.0
        %1562 = vmatprep.subr.mxu0 0.0
        %1563 = vmatpush1.msra.mxu0 0.0
        %1564 = vmatprep.subr.mxu0 0.0
        %1565 = vmatpush1.msra.mxu0 0.0
        %1566 = vmatprep.subr.mxu0 0.0
        %1567 = vmatpush1.msra.mxu0 0.0
        %1568 = vmatprep.subr.mxu0 0.0
        %1569 = vmatpush1.msra.mxu0 0.0
        %1570 = vmatprep.subr.mxu0 0.0
        %1571 = vmatpush1.msra.mxu0 0.0
        %1572 = vmatprep.subr.mxu0 0.0
        %1573 = vmatpush1.msra.mxu0 0.0
        %1574 = vmatprep.subr.mxu0 0.0
        %1575 = vmatpush1.msra.mxu0 0.0
        %1576 = vmatprep.subr.mxu0 0.0
        %1577 = vmatpush1.msra.mxu0 0.0
        %1578 = vmatprep.subr.mxu0 0.0
        %1579 = vmatpush1.msra.mxu0 0.0
        %1580 = vmatprep.subr.mxu0 0.0
        %1581 = vmatpush1.msra.mxu0 0.0
        %1582 = vmatprep.subr.mxu0 0.0
        %1583 = vmatpush1.msra.mxu0 0.0
        %1584 = vmatprep.subr.mxu0 0.0
        %1585 = vmatpush1.msra.mxu0 0.0
        %1586 = vmatprep.subr.mxu0 0.0
        %1587 = vmatpush1.msra.mxu0 0.0
        %1588 = vmatprep.subr.mxu0 0.0
        %1589 = vmatpush1.msra.mxu0 0.0
        %1590 = vmatprep.subr.mxu0 0.0
        %1591 = vmatpush1.msra.mxu0 0.0
        %1592 = vmatprep.mubr.f32.mxu0 0.0
        %1593 = vmatmul.mubr.f32.gmra.mrb[0].mxu0 %v1504
        %v1594 = vpop.f32.mrb[0].mxu0
        %v1595 = vadd.f32 %v1526, %v1594
        %v1596 = vpop.f32.mrb[0].mxu0
        %1597 = vdwg.mxu0
        %1598 = vst.msk [vmem:[%s424] sm:$0xff] %vm658, %v1595
        %s1599 = sand.u32 %s247, 1
        %s1600 = scalar_lea.sflag [#allocation9], %s1599
        %s1601 = sand.u32 %s247, 1
        %s1602 = smul.addr %s1601, 8
        %s1603 = scalar_lea.vmem [#allocation10], %s1602
        // Predicated region
        $region103: #{tpu_custom_call.1} parent=89 // pred_check
          %p1604 = pneg %p257
        $region104: #{tpu_custom_call.1} parent=89 // pred_check_branch
          %1606 = sbr.rel (%p1604) target = $region106
        $region105: #{tpu_custom_call.1} parent=89 // pred_region
          %s1608 = ssub.s32 128, 128
          %1609 = vsyncadd %s1600, %s1608
          %s1610 = sadd.s32 %s29, %s28
          %s1611 = smul.addr %s1610, 128
          %s1612 = scalar_lea.hbm %s9, %s1611
          %s1614 = sshll.u32 %s1603, 4
          %s1615 = int_to_ptr.vmem [resolvable:$true] %s1614
          %1617 = dma.vmem_to_hbm [thread:$0]  %s1615, 128, %s1612, %s1600
        $region106: #{tpu_custom_call.1} parent=89 // pred_fallthru
          _
      $region90: #{tpu_custom_call.1} parent=5 // pred_fallthru
        _
      %p1618 = scmp.le.s32.totalorder 2, %s19
      // Predicated region
      $region107: #{tpu_custom_call.1} parent=5 // pred_check
        %p1619 = pneg %p1618
      $region108: #{tpu_custom_call.1} parent=5 // pred_check_branch
        %1621 = sbr.rel (%p1619) target = $region110
      $region109: #{tpu_custom_call.1} parent=5 // pred_region
        %s1622 = ssub.s32 %s19, 2
        // Predicated region
        $region111: #{tpu_custom_call.1} parent=109 // pred_check
          %p1623 = pneg %p263
        $region112: #{tpu_custom_call.1} parent=109 // pred_check_branch
          %1625 = sbr.rel (%p1623) target = $region114
        $region113: #{tpu_custom_call.1} parent=109 // pred_region
          %s1626 = sand.u32 %s248, 1
          %s1627 = scalar_lea.sflag [#allocation9], %s1626
          %s1628 = sand.u32 %s248, 1
          %s1629 = smul.addr %s1628, 8
          %s1630 = scalar_lea.vmem [#allocation10], %s1629
          %1631 = dma.done %s1627, 128
        $region114: #{tpu_custom_call.1} parent=109 // pred_fallthru
          _
      $region110: #{tpu_custom_call.1} parent=5 // pred_fallthru
        _
    $region6: #{tpu_custom_call.1} parent=1 // loop_footer
      %s23 = sadd.s32 1, %s19
    $region7: #{tpu_custom_call.1} parent=1 // loop_footer_branch
      %18 = sbr.rel target = $region3
    $region8: #{tpu_custom_call.1} parent=1 // loop_exit
      _
    %1632 = vsyncpa [#allocation8], 1
    %s1633 = scalar_lea.sflag [#allocation8], 1
    %1634 = vsyncpa %s1633, 1
    %1635 = vsyncpa [#allocation9], 1
    %s1636 = scalar_lea.sflag [#allocation9], 1
    %1637 = vsyncpa %s1636, 1

</llo_original>
